<compile_context>
chip_gen: v5e
topology: v5e:2x2
jax: 0.10.0
libtpu: 0.0.40
codegen_flags: <defaults>
</compile_context>

<pallas_src>
import math

import jax
import jax.numpy as jnp
from jax.experimental import pallas as pl
from jax.experimental.pallas import tpu as pltpu

# ----------------------------- config (small, consistent with the module) ----
B = 2            # batch
S = 8            # sequence length
H = 32           # hidden_size
NH = 4           # num_heads
DH = H // NH     # head dim
FF = 4 * H       # intermediate size
NUM_LAYERS = 2
VOCAB = 100
MAX_POS = 16
LN_EPS = 1e-12

# ----------------------------- weight-slab layout ----------------------------
# One f32 slab of shape (SLAB_ROWS, 128); all row offsets of matrices are 8-aligned.
#   rows 0..7                : embedding LayerNorm (row0=gamma, row1=beta, cols 0:H)
#   per layer l, base = 8 + l*LAYER_ROWS:
#     base +   0 .. +H-1     : wqkv (H, 3H)   cols 0:3H   (fused q|k|v projection)
#     base +   H .. +2H-1    : wo   (H, H)    cols 0:H
#     base +  2H .. +3H-1    : wi   (H, FF)   cols 0:FF
#     base +  3H .. +4H-1    : w2t  (H, FF)   cols 0:FF   (output Linear weight, used as A@W^T)
#     base +  4H + 0         : bqkv (1, 3H)
#     base +  4H + 1         : bo   (1, H)
#     base +  4H + 2         : bi   (1, FF)
#     base +  4H + 3         : b2   (1, H)
#     base +  4H + 4..7      : ln1_g, ln1_b, ln2_g, ln2_b (1, H each)
EMB_ROWS = 8
LAYER_ROWS = 4 * H + 8                               # 136 (multiple of 8)
SLAB_ROWS = EMB_ROWS + NUM_LAYERS * LAYER_ROWS       # 280
SLAB_COLS = FF                                       # 128 (lane-dense slab)


# ----------------------------- in-kernel helpers -----------------------------
def _layer_norm(x, g, b):
    mu = jnp.mean(x, axis=-1, keepdims=True)
    var = jnp.mean((x - mu) ** 2, axis=-1, keepdims=True)
    return (x - mu) * jax.lax.rsqrt(var + LN_EPS) * g + b


def _gelu_exact(x):
    # F.gelu default = exact erf formulation
    return 0.5 * x * (1.0 + jax.lax.erf(x * (1.0 / math.sqrt(2.0))))


# ----------------------------- fused BERT kernel ------------------------------
def bert_fused_kernel(x_ref, mask_ref, w_ref, out_ref):
    w = w_ref
    # embeddings already summed in the wrapper -> LayerNorm here
    x = _layer_norm(x_ref[...], w[0:1, 0:H], w[1:2, 0:H])          # (B*S, H)
    mask_add = mask_ref[...]                                        # (B, 1, S) additive
    scale = 1.0 / math.sqrt(DH)

    # TODO(synk): when NUM_LAYERS grows, switch this static unroll to lax.fori_loop
    # indexing a per-layer-stacked slab (static unroll inflates live ranges/spills).
    for l in range(NUM_LAYERS):
        base = EMB_ROWS + l * LAYER_ROWS
        wqkv = w[base + 0 * H: base + 1 * H, 0:3 * H]               # (H, 3H)
        wo   = w[base + 1 * H: base + 2 * H, 0:H]                   # (H, H)
        wi   = w[base + 2 * H: base + 3 * H, :]                     # (H, FF)
        w2t  = w[base + 3 * H: base + 4 * H, :]                     # (H, FF)
        vrow = base + 4 * H
        bqkv  = w[vrow + 0: vrow + 1, 0:3 * H]                      # (1, 3H)
        bo    = w[vrow + 1: vrow + 2, 0:H]
        bi    = w[vrow + 2: vrow + 3, :]
        b2    = w[vrow + 3: vrow + 4, 0:H]
        ln1_g = w[vrow + 4: vrow + 5, 0:H]
        ln1_b = w[vrow + 5: vrow + 6, 0:H]
        ln2_g = w[vrow + 6: vrow + 7, 0:H]
        ln2_b = w[vrow + 7: vrow + 8, 0:H]

        # ---- fused QKV projection: one MXU push over all rows and all heads ----
        qkv = jnp.dot(x, wqkv, preferred_element_type=jnp.float32) + bqkv   # (B*S, 3H)

        # ---- attention: static head loop, einsums batched over B ----
        ctx_heads = []
        for n in range(NH):
            qh = qkv[:, 0 * H + n * DH: 0 * H + (n + 1) * DH].reshape(B, S, DH)
            kh = qkv[:, 1 * H + n * DH: 1 * H + (n + 1) * DH].reshape(B, S, DH)
            vh = qkv[:, 2 * H + n * DH: 2 * H + (n + 1) * DH].reshape(B, S, DH)
            s = jnp.einsum("bqd,bkd->bqk", qh, kh,
                           preferred_element_type=jnp.float32) * scale      # (B, S, S)
            s = s + mask_add                                                 # key mask
            m = jnp.max(s, axis=-1, keepdims=True)
            e = jnp.exp(s - m)
            p = e * pl.reciprocal(jnp.sum(e, axis=-1, keepdims=True), approx=True)
            c = jnp.einsum("bqk,bkd->bqd", p, vh,
                           preferred_element_type=jnp.float32)               # (B, S, DH)
            ctx_heads.append(c.reshape(B * S, DH))
        ctx = jnp.concatenate(ctx_heads, axis=-1)                            # (B*S, H)

        # ---- single output projection + residual + LN (dropout = identity) ----
        attn = jnp.dot(ctx, wo, preferred_element_type=jnp.float32) + bo
        h1 = _layer_norm(x + attn, ln1_g, ln1_b)

        # ---- feed-forward (exact-erf GELU); second matmul is A @ W^T form ----
        inter = _gelu_exact(
            jnp.dot(h1, wi, preferred_element_type=jnp.float32) + bi)        # (B*S, FF)
        ffn = jax.lax.dot_general(inter, w2t, (((1,), (1,)), ((), ())),
                                  preferred_element_type=jnp.float32) + b2   # (B*S, H)
        x = _layer_norm(h1 + ffn, ln2_g, ln2_b)

    out_ref[...] = x


def bert_fused_pallas(x_emb, mask_add, slab):
    vmem = pl.BlockSpec(memory_space=pltpu.MemorySpace.VMEM)
    # Single invocation, no grid: whole arrays are DMA'd to VMEM once (~0.14 MiB of
    # weights), the hidden state never leaves VMEM/vregs, and there is no per-step
    # dispatch overhead.  On v7x this runs on one TensorCore; splitting B=2 across
    # cores only pays once per-core work exceeds the fixed overhead it re-introduces.
    return pl.pallas_call(
        bert_fused_kernel,
        out_shape=jax.ShapeDtypeStruct((B * S, H), jnp.float32),
        in_specs=[vmem, vmem, vmem],
        out_specs=vmem,
    )(x_emb, mask_add, slab)


# ----------------------------- parameter packing (wrapper glue) --------------
def _pack_params_slab(params):
    """Pack every weight / bias / LN param into one contiguous (SLAB_ROWS, 128) slab."""
    slab = jnp.zeros((SLAB_ROWS, SLAB_COLS), jnp.float32)

    def put(sl, row, arr):
        r, c = arr.shape
        return sl.at[row:row + r, 0:c].set(arr.astype(jnp.float32))

    slab = put(slab, 0, params["emb_ln_g"])
    slab = put(slab, 1, params["emb_ln_b"])
    for l, lp in enumerate(params["layers"]):
        base = EMB_ROWS + l * LAYER_ROWS
        wqkv = jnp.concatenate([lp["wqT"], lp["wkT"], lp["wvT"]], axis=1)   # (H, 3H)
        bqkv = jnp.concatenate([lp["bq"], lp["bk"], lp["bv"]], axis=1)      # (1, 3H)
        slab = put(slab, base + 0 * H, wqkv)
        slab = put(slab, base + 1 * H, lp["woT"])        # (H, H)
        slab = put(slab, base + 2 * H, lp["wiT"])        # (H, FF)
        slab = put(slab, base + 3 * H, lp["w2T"].T)      # store as (H, FF); used A@W^T
        vrow = base + 4 * H
        slab = put(slab, vrow + 0, bqkv)
        slab = put(slab, vrow + 1, lp["bo"])
        slab = put(slab, vrow + 2, lp["bi"])
        slab = put(slab, vrow + 3, lp["b2"])
        slab = put(slab, vrow + 4, lp["ln1_g"])
        slab = put(slab, vrow + 5, lp["ln1_b"])
        slab = put(slab, vrow + 6, lp["ln2_g"])
        slab = put(slab, vrow + 7, lp["ln2_b"])
    return slab


# ----------------------------- parameter init (deterministic) ----------------
def init_params(key):
    def nrm(k, shape, std=0.02):
        return jax.random.normal(k, shape, jnp.float32) * std

    keys = jax.random.split(key, 3 + NUM_LAYERS)
    p = {
        "word_emb": nrm(keys[0], (VOCAB, H)),
        "pos_emb": nrm(keys[1], (MAX_POS, H)),
        "tok_emb": nrm(keys[2], (2, H)),
        "emb_ln_g": jnp.ones((1, H), jnp.float32),
        "emb_ln_b": jnp.zeros((1, H), jnp.float32),
        "layers": [],
    }
    for l in range(NUM_LAYERS):
        k = jax.random.split(keys[3 + l], 8)
        in_proj_w = nrm(k[0], (3 * H, H))                # nn.MultiheadAttention in_proj
        in_proj_b = nrm(k[1], (3 * H,))
        layer = {
            "wqT": in_proj_w[0:H].T,
            "wkT": in_proj_w[H:2 * H].T,
            "wvT": in_proj_w[2 * H:].T,
            "bq": in_proj_b[0:H].reshape(1, H),
            "bk": in_proj_b[H:2 * H].reshape(1, H),
            "bv": in_proj_b[2 * H:].reshape(1, H),
            "woT": nrm(k[2], (H, H)).T,                  # out_proj Linear(H, H)
            "bo": nrm(k[3], (H,)).reshape(1, H),
            "ln1_g": jnp.ones((1, H), jnp.float32),
            "ln1_b": jnp.zeros((1, H), jnp.float32),
            "wiT": nrm(k[4], (FF, H)).T,                 # intermediate Linear(H, 4H)
            "bi": nrm(k[5], (FF,)).reshape(1, FF),
            "w2T": nrm(k[6], (H, FF)).T,                 # output Linear(4H, H)
            "b2": nrm(k[7], (H,)).reshape(1, H),
            "ln2_g": jnp.ones((1, H), jnp.float32),
            "ln2_b": jnp.zeros((1, H), jnp.float32),
        }
        p["layers"].append(layer)
    return p


# ----------------------------- full forward (glue + fused kernel) ------------
def bert_forward(params, input_ids, token_type_ids=None, attention_mask=None):
    b, s = input_ids.shape
    assert (b, s) == (B, S)
    if token_type_ids is None:
        token_type_ids = jnp.zeros_like(input_ids)
    if attention_mask is None:
        attention_mask = jnp.ones((b, s), jnp.float32)

    # embedding-table gathers (glue; tables are tiny at this config)
    # TODO(synk): for real vocab sizes, gather in-kernel via PrefetchScalarGridSpec
    #             + pl.Element row gather instead of materializing (B,S,H) in HBM.
    we = params["word_emb"][input_ids]               # (B, S, H)
    te = params["tok_emb"][token_type_ids]           # (B, S, H)
    pe = params["pos_emb"][:s]                       # (S, H)
    x_emb = (we + te + pe[None, :, :]).reshape(B * S, H).astype(jnp.float32)

    # key_padding_mask -> additive key mask (-1e9 stands in for -inf on masked keys)
    mask_add = jnp.where(attention_mask == 0, -1e9, 0.0).astype(jnp.float32)[:, None, :]

    slab = _pack_params_slab(params)
    out = bert_fused_pallas(x_emb, mask_add, slab)   # (B*S, H)
    return out.reshape(B, S, H)


# ----------------------------- pure-JAX reference (sanity) -------------------
def reference_forward(params, input_ids, token_type_ids, attention_mask):
    def ln(x, g, b):
        mu = x.mean(-1, keepdims=True)
        var = ((x - mu) ** 2).mean(-1, keepdims=True)
        return (x - mu) / jnp.sqrt(var + LN_EPS) * g + b

    b, s = input_ids.shape
    x = (params["word_emb"][input_ids]
         + params["pos_emb"][jnp.arange(s)][None]
         + params["tok_emb"][token_type_ids])
    x = ln(x, params["emb_ln_g"], params["emb_ln_b"])
    madd = jnp.where(attention_mask == 0, -1e9, 0.0)[:, None, None, :]
    for lp in params["layers"]:
        q = x @ lp["wqT"] + lp["bq"]
        k = x @ lp["wkT"] + lp["bk"]
        v = x @ lp["wvT"] + lp["bv"]
        qh = q.reshape(b, s, NH, DH).transpose(0, 2, 1, 3)
        kh = k.reshape(b, s, NH, DH).transpose(0, 2, 1, 3)
        vh = v.reshape(b, s, NH, DH).transpose(0, 2, 1, 3)
        sc = jnp.einsum("bhqd,bhkd->bhqk", qh, kh) / math.sqrt(DH) + madd
        p = jax.nn.softmax(sc, axis=-1)
        ctx = jnp.einsum("bhqk,bhkd->bhqd", p, vh).transpose(0, 2, 1, 3).reshape(b, s, H)
        attn_out = ctx @ lp["woT"] + lp["bo"]
        h1 = ln(x + attn_out, lp["ln1_g"], lp["ln1_b"])
        pre = h1 @ lp["wiT"] + lp["bi"]
        inter = 0.5 * pre * (1.0 + jax.lax.erf(pre / math.sqrt(2.0)))
        ffn = inter @ lp["w2T"] + lp["b2"]
        x = ln(h1 + ffn, lp["ln2_g"], lp["ln2_b"])
    return x


# ----------------------------- main ------------------------------------------
if __name__ == "__main__":
    key = jax.random.PRNGKey(0)
    pkey, ikey = jax.random.split(key)
    params = init_params(pkey)

    input_ids = jax.random.randint(ikey, (B, S), 0, VOCAB, dtype=jnp.int32)
    token_type_ids = jnp.zeros((B, S), jnp.int32)
    attention_mask = jnp.ones((B, S), jnp.float32)

    hidden = bert_forward(params, input_ids, token_type_ids, attention_mask)
    hidden = jax.block_until_ready(hidden)

    ref = reference_forward(params, input_ids, token_type_ids, attention_mask)
    max_diff = float(jnp.max(jnp.abs(hidden - ref)))

    assert hidden.shape == (B, S, H)
    assert bool(jnp.all(jnp.isfinite(hidden)))
    # f32 path; slack covers MXU matmul rounding + approx EUP reciprocal in softmax
    assert max_diff < 1e-2, f"max diff {max_diff}"
    print("KERNEL_OK")
</pallas_src>

<mosaic_0001>
module attributes {stable_mosaic.version = 11 : i64} {
  func.func @bert_fused_kernel(%arg0: memref<16x32xf32, #tpu.memory_space<vmem>>, %arg1: memref<2x1x8xf32, #tpu.memory_space<vmem>>, %arg2: memref<280x128xf32, #tpu.memory_space<vmem>>, %arg3: memref<16x32xf32, #tpu.memory_space<vmem>>) attributes {dimension_semantics = [], scalar_prefetch = 0 : i64, scratch_operands = 0 : i64, tpu.core_type = #tpu.core_type<tc>} {
    %c0 = arith.constant 0 : index
    %c0_0 = arith.constant 0 : index
    %0 = vector.load %arg0[%c0, %c0_0] : memref<16x32xf32, #tpu.memory_space<vmem>>, vector<16x32xf32>
    %c0_1 = arith.constant 0 : index
    %c0_2 = arith.constant 0 : index
    %1 = vector.load %arg2[%c0_1, %c0_2] : memref<280x128xf32, #tpu.memory_space<vmem>>, vector<1x32xf32>
    %c1 = arith.constant 1 : index
    %c0_3 = arith.constant 0 : index
    %2 = vector.load %arg2[%c1, %c0_3] : memref<280x128xf32, #tpu.memory_space<vmem>>, vector<1x32xf32>
    %cst = arith.constant dense<0.000000e+00> : vector<16xf32>
    %3 = vector.multi_reduction <add>, %0, %cst [1] : vector<16x32xf32> to vector<16xf32>
    %4 = vector.shape_cast %3 : vector<16xf32> to vector<16x1xf32>
    %cst_4 = arith.constant 3.200000e+01 : f32
    %5 = vector.broadcast %cst_4 : f32 to vector<16x1xf32>
    %6 = arith.divf %4, %5 : vector<16x1xf32>
    %7 = vector.broadcast %6 : vector<16x1xf32> to vector<16x32xf32>
    %8 = arith.subf %0, %7 : vector<16x32xf32>
    %9 = arith.mulf %8, %8 : vector<16x32xf32>
    %cst_5 = arith.constant dense<0.000000e+00> : vector<16xf32>
    %10 = vector.multi_reduction <add>, %9, %cst_5 [1] : vector<16x32xf32> to vector<16xf32>
    %11 = vector.shape_cast %10 : vector<16xf32> to vector<16x1xf32>
    %cst_6 = arith.constant 3.200000e+01 : f32
    %12 = vector.broadcast %cst_6 : f32 to vector<16x1xf32>
    %13 = arith.divf %11, %12 : vector<16x1xf32>
    %14 = vector.broadcast %6 : vector<16x1xf32> to vector<16x32xf32>
    %15 = arith.subf %0, %14 : vector<16x32xf32>
    %cst_7 = arith.constant 9.99999996E-13 : f32
    %16 = vector.broadcast %cst_7 : f32 to vector<16x1xf32>
    %17 = arith.addf %13, %16 : vector<16x1xf32>
    %18 = math.rsqrt %17 : vector<16x1xf32>
    %19 = vector.broadcast %18 : vector<16x1xf32> to vector<16x32xf32>
    %20 = arith.mulf %15, %19 : vector<16x32xf32>
    %21 = vector.broadcast %1 : vector<1x32xf32> to vector<16x32xf32>
    %22 = arith.mulf %20, %21 : vector<16x32xf32>
    %23 = vector.broadcast %2 : vector<1x32xf32> to vector<16x32xf32>
    %24 = arith.addf %22, %23 : vector<16x32xf32>
    %c0_8 = arith.constant 0 : index
    %c0_9 = arith.constant 0 : index
    %c0_10 = arith.constant 0 : index
    %25 = vector.load %arg1[%c0_8, %c0_9, %c0_10] : memref<2x1x8xf32, #tpu.memory_space<vmem>>, vector<2x1x8xf32>
    %c8 = arith.constant 8 : index
    %c0_11 = arith.constant 0 : index
    %26 = vector.load %arg2[%c8, %c0_11] : memref<280x128xf32, #tpu.memory_space<vmem>>, vector<32x96xf32>
    %c40 = arith.constant 40 : index
    %c0_12 = arith.constant 0 : index
    %27 = vector.load %arg2[%c40, %c0_12] : memref<280x128xf32, #tpu.memory_space<vmem>>, vector<32x32xf32>
    %c72 = arith.constant 72 : index
    %c0_13 = arith.constant 0 : index
    %28 = vector.load %arg2[%c72, %c0_13] : memref<280x128xf32, #tpu.memory_space<vmem>>, vector<32x128xf32>
    %c104 = arith.constant 104 : index
    %c0_14 = arith.constant 0 : index
    %29 = vector.load %arg2[%c104, %c0_14] : memref<280x128xf32, #tpu.memory_space<vmem>>, vector<32x128xf32>
    %c136 = arith.constant 136 : index
    %c0_15 = arith.constant 0 : index
    %30 = vector.load %arg2[%c136, %c0_15] : memref<280x128xf32, #tpu.memory_space<vmem>>, vector<1x96xf32>
    %c137 = arith.constant 137 : index
    %c0_16 = arith.constant 0 : index
    %31 = vector.load %arg2[%c137, %c0_16] : memref<280x128xf32, #tpu.memory_space<vmem>>, vector<1x32xf32>
    %c138 = arith.constant 138 : index
    %c0_17 = arith.constant 0 : index
    %32 = vector.load %arg2[%c138, %c0_17] : memref<280x128xf32, #tpu.memory_space<vmem>>, vector<1x128xf32>
    %c139 = arith.constant 139 : index
    %c0_18 = arith.constant 0 : index
    %33 = vector.load %arg2[%c139, %c0_18] : memref<280x128xf32, #tpu.memory_space<vmem>>, vector<1x32xf32>
    %c140 = arith.constant 140 : index
    %c0_19 = arith.constant 0 : index
    %34 = vector.load %arg2[%c140, %c0_19] : memref<280x128xf32, #tpu.memory_space<vmem>>, vector<1x32xf32>
    %c141 = arith.constant 141 : index
    %c0_20 = arith.constant 0 : index
    %35 = vector.load %arg2[%c141, %c0_20] : memref<280x128xf32, #tpu.memory_space<vmem>>, vector<1x32xf32>
    %c142 = arith.constant 142 : index
    %c0_21 = arith.constant 0 : index
    %36 = vector.load %arg2[%c142, %c0_21] : memref<280x128xf32, #tpu.memory_space<vmem>>, vector<1x32xf32>
    %c143 = arith.constant 143 : index
    %c0_22 = arith.constant 0 : index
    %37 = vector.load %arg2[%c143, %c0_22] : memref<280x128xf32, #tpu.memory_space<vmem>>, vector<1x32xf32>
    %cst_23 = arith.constant dense<0.000000e+00> : vector<16x96xf32>
    %38 = tpu.matmul %24, %26, %cst_23 {dimension_numbers = #tpu.dot_dimension_numbers<[1], [0], [0], [1], [0, 0, 1, 1], [], []>} : vector<16x32xf32>, vector<32x96xf32>, vector<16x96xf32> -> vector<16x96xf32>
    %39 = vector.broadcast %30 : vector<1x96xf32> to vector<16x96xf32>
    %40 = arith.addf %38, %39 : vector<16x96xf32>
    %41 = vector.extract_strided_slice %40 {offsets = [0, 0], sizes = [16, 8], strides = [1, 1]} : vector<16x96xf32> to vector<16x8xf32>
    %42 = vector.shape_cast %41 : vector<16x8xf32> to vector<2x8x8xf32>
    %43 = vector.extract_strided_slice %40 {offsets = [0, 32], sizes = [16, 8], strides = [1, 1]} : vector<16x96xf32> to vector<16x8xf32>
    %44 = vector.shape_cast %43 : vector<16x8xf32> to vector<2x8x8xf32>
    %45 = vector.extract_strided_slice %40 {offsets = [0, 64], sizes = [16, 8], strides = [1, 1]} : vector<16x96xf32> to vector<16x8xf32>
    %46 = vector.shape_cast %45 : vector<16x8xf32> to vector<2x8x8xf32>
    "tpu.trace_start"() <{level = 10 : i32, message = "bqd,bkd->bqk"}> : () -> ()
    %cst_24 = arith.constant dense<0.000000e+00> : vector<2x8x8xf32>
    %47 = tpu.matmul %42, %44, %cst_24 {dimension_numbers = #tpu.dot_dimension_numbers<[2], [2], [1], [1], [0, 0, 0, 1, 1, 1], [0], [0]>} : vector<2x8x8xf32>, vector<2x8x8xf32>, vector<2x8x8xf32> -> vector<2x8x8xf32>
    "tpu.trace_stop"() : () -> ()
    %cst_25 = arith.constant 0.353553385 : f32
    %48 = vector.broadcast %cst_25 : f32 to vector<2x8x8xf32>
    %49 = arith.mulf %47, %48 : vector<2x8x8xf32>
    %50 = vector.broadcast %25 : vector<2x1x8xf32> to vector<2x8x8xf32>
    %51 = arith.addf %49, %50 : vector<2x8x8xf32>
    %cst_26 = arith.constant dense<0xFF800000> : vector<2x8xf32>
    %52 = vector.multi_reduction <maximumf>, %51, %cst_26 [2] : vector<2x8x8xf32> to vector<2x8xf32>
    %53 = vector.shape_cast %52 : vector<2x8xf32> to vector<2x8x1xf32>
    %54 = vector.broadcast %53 : vector<2x8x1xf32> to vector<2x8x8xf32>
    %55 = arith.subf %51, %54 : vector<2x8x8xf32>
    %56 = math.exp %55 : vector<2x8x8xf32>
    %cst_27 = arith.constant dense<0.000000e+00> : vector<2x8xf32>
    %57 = vector.multi_reduction <add>, %56, %cst_27 [2] : vector<2x8x8xf32> to vector<2x8xf32>
    %58 = vector.shape_cast %57 : vector<2x8xf32> to vector<2x8x1xf32>
    %59 = tpu.reciprocal %58 {approx = true} : vector<2x8x1xf32> -> vector<2x8x1xf32>
    %60 = vector.broadcast %59 : vector<2x8x1xf32> to vector<2x8x8xf32>
    %61 = arith.mulf %56, %60 : vector<2x8x8xf32>
    "tpu.trace_start"() <{level = 10 : i32, message = "bqk,bkd->bqd"}> : () -> ()
    %cst_28 = arith.constant dense<0.000000e+00> : vector<2x8x8xf32>
    %62 = tpu.matmul %61, %46, %cst_28 {dimension_numbers = #tpu.dot_dimension_numbers<[2], [1], [1], [2], [0, 0, 0, 1, 1, 2], [0], [0]>} : vector<2x8x8xf32>, vector<2x8x8xf32>, vector<2x8x8xf32> -> vector<2x8x8xf32>
    "tpu.trace_stop"() : () -> ()
    %63 = vector.shape_cast %62 : vector<2x8x8xf32> to vector<16x8xf32>
    %64 = vector.extract_strided_slice %40 {offsets = [0, 8], sizes = [16, 8], strides = [1, 1]} : vector<16x96xf32> to vector<16x8xf32>
    %65 = vector.shape_cast %64 : vector<16x8xf32> to vector<2x8x8xf32>
    %66 = vector.extract_strided_slice %40 {offsets = [0, 40], sizes = [16, 8], strides = [1, 1]} : vector<16x96xf32> to vector<16x8xf32>
    %67 = vector.shape_cast %66 : vector<16x8xf32> to vector<2x8x8xf32>
    %68 = vector.extract_strided_slice %40 {offsets = [0, 72], sizes = [16, 8], strides = [1, 1]} : vector<16x96xf32> to vector<16x8xf32>
    %69 = vector.shape_cast %68 : vector<16x8xf32> to vector<2x8x8xf32>
    "tpu.trace_start"() <{level = 10 : i32, message = "bqd,bkd->bqk"}> : () -> ()
    %cst_29 = arith.constant dense<0.000000e+00> : vector<2x8x8xf32>
    %70 = tpu.matmul %65, %67, %cst_29 {dimension_numbers = #tpu.dot_dimension_numbers<[2], [2], [1], [1], [0, 0, 0, 1, 1, 1], [0], [0]>} : vector<2x8x8xf32>, vector<2x8x8xf32>, vector<2x8x8xf32> -> vector<2x8x8xf32>
    "tpu.trace_stop"() : () -> ()
    %cst_30 = arith.constant 0.353553385 : f32
    %71 = vector.broadcast %cst_30 : f32 to vector<2x8x8xf32>
    %72 = arith.mulf %70, %71 : vector<2x8x8xf32>
    %73 = vector.broadcast %25 : vector<2x1x8xf32> to vector<2x8x8xf32>
    %74 = arith.addf %72, %73 : vector<2x8x8xf32>
    %cst_31 = arith.constant dense<0xFF800000> : vector<2x8xf32>
    %75 = vector.multi_reduction <maximumf>, %74, %cst_31 [2] : vector<2x8x8xf32> to vector<2x8xf32>
    %76 = vector.shape_cast %75 : vector<2x8xf32> to vector<2x8x1xf32>
    %77 = vector.broadcast %76 : vector<2x8x1xf32> to vector<2x8x8xf32>
    %78 = arith.subf %74, %77 : vector<2x8x8xf32>
    %79 = math.exp %78 : vector<2x8x8xf32>
    %cst_32 = arith.constant dense<0.000000e+00> : vector<2x8xf32>
    %80 = vector.multi_reduction <add>, %79, %cst_32 [2] : vector<2x8x8xf32> to vector<2x8xf32>
    %81 = vector.shape_cast %80 : vector<2x8xf32> to vector<2x8x1xf32>
    %82 = tpu.reciprocal %81 {approx = true} : vector<2x8x1xf32> -> vector<2x8x1xf32>
    %83 = vector.broadcast %82 : vector<2x8x1xf32> to vector<2x8x8xf32>
    %84 = arith.mulf %79, %83 : vector<2x8x8xf32>
    "tpu.trace_start"() <{level = 10 : i32, message = "bqk,bkd->bqd"}> : () -> ()
    %cst_33 = arith.constant dense<0.000000e+00> : vector<2x8x8xf32>
    %85 = tpu.matmul %84, %69, %cst_33 {dimension_numbers = #tpu.dot_dimension_numbers<[2], [1], [1], [2], [0, 0, 0, 1, 1, 2], [0], [0]>} : vector<2x8x8xf32>, vector<2x8x8xf32>, vector<2x8x8xf32> -> vector<2x8x8xf32>
    "tpu.trace_stop"() : () -> ()
    %86 = vector.shape_cast %85 : vector<2x8x8xf32> to vector<16x8xf32>
    %87 = vector.extract_strided_slice %40 {offsets = [0, 16], sizes = [16, 8], strides = [1, 1]} : vector<16x96xf32> to vector<16x8xf32>
    %88 = vector.shape_cast %87 : vector<16x8xf32> to vector<2x8x8xf32>
    %89 = vector.extract_strided_slice %40 {offsets = [0, 48], sizes = [16, 8], strides = [1, 1]} : vector<16x96xf32> to vector<16x8xf32>
    %90 = vector.shape_cast %89 : vector<16x8xf32> to vector<2x8x8xf32>
    %91 = vector.extract_strided_slice %40 {offsets = [0, 80], sizes = [16, 8], strides = [1, 1]} : vector<16x96xf32> to vector<16x8xf32>
    %92 = vector.shape_cast %91 : vector<16x8xf32> to vector<2x8x8xf32>
    "tpu.trace_start"() <{level = 10 : i32, message = "bqd,bkd->bqk"}> : () -> ()
    %cst_34 = arith.constant dense<0.000000e+00> : vector<2x8x8xf32>
    %93 = tpu.matmul %88, %90, %cst_34 {dimension_numbers = #tpu.dot_dimension_numbers<[2], [2], [1], [1], [0, 0, 0, 1, 1, 1], [0], [0]>} : vector<2x8x8xf32>, vector<2x8x8xf32>, vector<2x8x8xf32> -> vector<2x8x8xf32>
    "tpu.trace_stop"() : () -> ()
    %cst_35 = arith.constant 0.353553385 : f32
    %94 = vector.broadcast %cst_35 : f32 to vector<2x8x8xf32>
    %95 = arith.mulf %93, %94 : vector<2x8x8xf32>
    %96 = vector.broadcast %25 : vector<2x1x8xf32> to vector<2x8x8xf32>
    %97 = arith.addf %95, %96 : vector<2x8x8xf32>
    %cst_36 = arith.constant dense<0xFF800000> : vector<2x8xf32>
    %98 = vector.multi_reduction <maximumf>, %97, %cst_36 [2] : vector<2x8x8xf32> to vector<2x8xf32>
    %99 = vector.shape_cast %98 : vector<2x8xf32> to vector<2x8x1xf32>
    %100 = vector.broadcast %99 : vector<2x8x1xf32> to vector<2x8x8xf32>
    %101 = arith.subf %97, %100 : vector<2x8x8xf32>
    %102 = math.exp %101 : vector<2x8x8xf32>
    %cst_37 = arith.constant dense<0.000000e+00> : vector<2x8xf32>
    %103 = vector.multi_reduction <add>, %102, %cst_37 [2] : vector<2x8x8xf32> to vector<2x8xf32>
    %104 = vector.shape_cast %103 : vector<2x8xf32> to vector<2x8x1xf32>
    %105 = tpu.reciprocal %104 {approx = true} : vector<2x8x1xf32> -> vector<2x8x1xf32>
    %106 = vector.broadcast %105 : vector<2x8x1xf32> to vector<2x8x8xf32>
    %107 = arith.mulf %102, %106 : vector<2x8x8xf32>
    "tpu.trace_start"() <{level = 10 : i32, message = "bqk,bkd->bqd"}> : () -> ()
    %cst_38 = arith.constant dense<0.000000e+00> : vector<2x8x8xf32>
    %108 = tpu.matmul %107, %92, %cst_38 {dimension_numbers = #tpu.dot_dimension_numbers<[2], [1], [1], [2], [0, 0, 0, 1, 1, 2], [0], [0]>} : vector<2x8x8xf32>, vector<2x8x8xf32>, vector<2x8x8xf32> -> vector<2x8x8xf32>
    "tpu.trace_stop"() : () -> ()
    %109 = vector.shape_cast %108 : vector<2x8x8xf32> to vector<16x8xf32>
    %110 = vector.extract_strided_slice %40 {offsets = [0, 24], sizes = [16, 8], strides = [1, 1]} : vector<16x96xf32> to vector<16x8xf32>
    %111 = vector.shape_cast %110 : vector<16x8xf32> to vector<2x8x8xf32>
    %112 = vector.extract_strided_slice %40 {offsets = [0, 56], sizes = [16, 8], strides = [1, 1]} : vector<16x96xf32> to vector<16x8xf32>
    %113 = vector.shape_cast %112 : vector<16x8xf32> to vector<2x8x8xf32>
    %114 = vector.extract_strided_slice %40 {offsets = [0, 88], sizes = [16, 8], strides = [1, 1]} : vector<16x96xf32> to vector<16x8xf32>
    %115 = vector.shape_cast %114 : vector<16x8xf32> to vector<2x8x8xf32>
    "tpu.trace_start"() <{level = 10 : i32, message = "bqd,bkd->bqk"}> : () -> ()
    %cst_39 = arith.constant dense<0.000000e+00> : vector<2x8x8xf32>
    %116 = tpu.matmul %111, %113, %cst_39 {dimension_numbers = #tpu.dot_dimension_numbers<[2], [2], [1], [1], [0, 0, 0, 1, 1, 1], [0], [0]>} : vector<2x8x8xf32>, vector<2x8x8xf32>, vector<2x8x8xf32> -> vector<2x8x8xf32>
    "tpu.trace_stop"() : () -> ()
    %cst_40 = arith.constant 0.353553385 : f32
    %117 = vector.broadcast %cst_40 : f32 to vector<2x8x8xf32>
    %118 = arith.mulf %116, %117 : vector<2x8x8xf32>
    %119 = vector.broadcast %25 : vector<2x1x8xf32> to vector<2x8x8xf32>
    %120 = arith.addf %118, %119 : vector<2x8x8xf32>
    %cst_41 = arith.constant dense<0xFF800000> : vector<2x8xf32>
    %121 = vector.multi_reduction <maximumf>, %120, %cst_41 [2] : vector<2x8x8xf32> to vector<2x8xf32>
    %122 = vector.shape_cast %121 : vector<2x8xf32> to vector<2x8x1xf32>
    %123 = vector.broadcast %122 : vector<2x8x1xf32> to vector<2x8x8xf32>
    %124 = arith.subf %120, %123 : vector<2x8x8xf32>
    %125 = math.exp %124 : vector<2x8x8xf32>
    %cst_42 = arith.constant dense<0.000000e+00> : vector<2x8xf32>
    %126 = vector.multi_reduction <add>, %125, %cst_42 [2] : vector<2x8x8xf32> to vector<2x8xf32>
    %127 = vector.shape_cast %126 : vector<2x8xf32> to vector<2x8x1xf32>
    %128 = tpu.reciprocal %127 {approx = true} : vector<2x8x1xf32> -> vector<2x8x1xf32>
    %129 = vector.broadcast %128 : vector<2x8x1xf32> to vector<2x8x8xf32>
    %130 = arith.mulf %125, %129 : vector<2x8x8xf32>
    "tpu.trace_start"() <{level = 10 : i32, message = "bqk,bkd->bqd"}> : () -> ()
    %cst_43 = arith.constant dense<0.000000e+00> : vector<2x8x8xf32>
    %131 = tpu.matmul %130, %115, %cst_43 {dimension_numbers = #tpu.dot_dimension_numbers<[2], [1], [1], [2], [0, 0, 0, 1, 1, 2], [0], [0]>} : vector<2x8x8xf32>, vector<2x8x8xf32>, vector<2x8x8xf32> -> vector<2x8x8xf32>
    "tpu.trace_stop"() : () -> ()
    %132 = vector.shape_cast %131 : vector<2x8x8xf32> to vector<16x8xf32>
    %133 = tpu.concatenate %63, %86, %109, %132 in 1 : vector<16x8xf32>, vector<16x8xf32>, vector<16x8xf32>, vector<16x8xf32> -> vector<16x32xf32>
    %cst_44 = arith.constant dense<0.000000e+00> : vector<16x32xf32>
    %134 = tpu.matmul %133, %27, %cst_44 {dimension_numbers = #tpu.dot_dimension_numbers<[1], [0], [0], [1], [0, 0, 1, 1], [], []>} : vector<16x32xf32>, vector<32x32xf32>, vector<16x32xf32> -> vector<16x32xf32>
    %135 = vector.broadcast %31 : vector<1x32xf32> to vector<16x32xf32>
    %136 = arith.addf %134, %135 : vector<16x32xf32>
    %137 = arith.addf %24, %136 : vector<16x32xf32>
    %cst_45 = arith.constant dense<0.000000e+00> : vector<16xf32>
    %138 = vector.multi_reduction <add>, %137, %cst_45 [1] : vector<16x32xf32> to vector<16xf32>
    %139 = vector.shape_cast %138 : vector<16xf32> to vector<16x1xf32>
    %cst_46 = arith.constant 3.200000e+01 : f32
    %140 = vector.broadcast %cst_46 : f32 to vector<16x1xf32>
    %141 = arith.divf %139, %140 : vector<16x1xf32>
    %142 = vector.broadcast %141 : vector<16x1xf32> to vector<16x32xf32>
    %143 = arith.subf %137, %142 : vector<16x32xf32>
    %144 = arith.mulf %143, %143 : vector<16x32xf32>
    %cst_47 = arith.constant dense<0.000000e+00> : vector<16xf32>
    %145 = vector.multi_reduction <add>, %144, %cst_47 [1] : vector<16x32xf32> to vector<16xf32>
    %146 = vector.shape_cast %145 : vector<16xf32> to vector<16x1xf32>
    %cst_48 = arith.constant 3.200000e+01 : f32
    %147 = vector.broadcast %cst_48 : f32 to vector<16x1xf32>
    %148 = arith.divf %146, %147 : vector<16x1xf32>
    %149 = vector.broadcast %141 : vector<16x1xf32> to vector<16x32xf32>
    %150 = arith.subf %137, %149 : vector<16x32xf32>
    %cst_49 = arith.constant 9.99999996E-13 : f32
    %151 = vector.broadcast %cst_49 : f32 to vector<16x1xf32>
    %152 = arith.addf %148, %151 : vector<16x1xf32>
    %153 = math.rsqrt %152 : vector<16x1xf32>
    %154 = vector.broadcast %153 : vector<16x1xf32> to vector<16x32xf32>
    %155 = arith.mulf %150, %154 : vector<16x32xf32>
    %156 = vector.broadcast %34 : vector<1x32xf32> to vector<16x32xf32>
    %157 = arith.mulf %155, %156 : vector<16x32xf32>
    %158 = vector.broadcast %35 : vector<1x32xf32> to vector<16x32xf32>
    %159 = arith.addf %157, %158 : vector<16x32xf32>
    %cst_50 = arith.constant dense<0.000000e+00> : vector<16x128xf32>
    %160 = tpu.matmul %159, %28, %cst_50 {dimension_numbers = #tpu.dot_dimension_numbers<[1], [0], [0], [1], [0, 0, 1, 1], [], []>} : vector<16x32xf32>, vector<32x128xf32>, vector<16x128xf32> -> vector<16x128xf32>
    %161 = vector.broadcast %32 : vector<1x128xf32> to vector<16x128xf32>
    %162 = arith.addf %160, %161 : vector<16x128xf32>
    %cst_51 = arith.constant 5.000000e-01 : f32
    %163 = vector.broadcast %cst_51 : f32 to vector<16x128xf32>
    %164 = arith.mulf %163, %162 : vector<16x128xf32>
    %cst_52 = arith.constant 0.707106769 : f32
    %165 = vector.broadcast %cst_52 : f32 to vector<16x128xf32>
    %166 = arith.mulf %162, %165 : vector<16x128xf32>
    %167 = math.erf %166 : vector<16x128xf32>
    %cst_53 = arith.constant 1.000000e+00 : f32
    %168 = vector.broadcast %cst_53 : f32 to vector<16x128xf32>
    %169 = arith.addf %168, %167 : vector<16x128xf32>
    %170 = arith.mulf %164, %169 : vector<16x128xf32>
    %cst_54 = arith.constant dense<0.000000e+00> : vector<16x32xf32>
    %171 = tpu.matmul %170, %29, %cst_54 {dimension_numbers = #tpu.dot_dimension_numbers<[1], [1], [0], [0], [0, 0, 1, 0], [], []>} : vector<16x128xf32>, vector<32x128xf32>, vector<16x32xf32> -> vector<16x32xf32>
    %172 = vector.broadcast %33 : vector<1x32xf32> to vector<16x32xf32>
    %173 = arith.addf %171, %172 : vector<16x32xf32>
    %174 = arith.addf %159, %173 : vector<16x32xf32>
    %cst_55 = arith.constant dense<0.000000e+00> : vector<16xf32>
    %175 = vector.multi_reduction <add>, %174, %cst_55 [1] : vector<16x32xf32> to vector<16xf32>
    %176 = vector.shape_cast %175 : vector<16xf32> to vector<16x1xf32>
    %cst_56 = arith.constant 3.200000e+01 : f32
    %177 = vector.broadcast %cst_56 : f32 to vector<16x1xf32>
    %178 = arith.divf %176, %177 : vector<16x1xf32>
    %179 = vector.broadcast %178 : vector<16x1xf32> to vector<16x32xf32>
    %180 = arith.subf %174, %179 : vector<16x32xf32>
    %181 = arith.mulf %180, %180 : vector<16x32xf32>
    %cst_57 = arith.constant dense<0.000000e+00> : vector<16xf32>
    %182 = vector.multi_reduction <add>, %181, %cst_57 [1] : vector<16x32xf32> to vector<16xf32>
    %183 = vector.shape_cast %182 : vector<16xf32> to vector<16x1xf32>
    %cst_58 = arith.constant 3.200000e+01 : f32
    %184 = vector.broadcast %cst_58 : f32 to vector<16x1xf32>
    %185 = arith.divf %183, %184 : vector<16x1xf32>
    %186 = vector.broadcast %178 : vector<16x1xf32> to vector<16x32xf32>
    %187 = arith.subf %174, %186 : vector<16x32xf32>
    %cst_59 = arith.constant 9.99999996E-13 : f32
    %188 = vector.broadcast %cst_59 : f32 to vector<16x1xf32>
    %189 = arith.addf %185, %188 : vector<16x1xf32>
    %190 = math.rsqrt %189 : vector<16x1xf32>
    %191 = vector.broadcast %190 : vector<16x1xf32> to vector<16x32xf32>
    %192 = arith.mulf %187, %191 : vector<16x32xf32>
    %193 = vector.broadcast %36 : vector<1x32xf32> to vector<16x32xf32>
    %194 = arith.mulf %192, %193 : vector<16x32xf32>
    %195 = vector.broadcast %37 : vector<1x32xf32> to vector<16x32xf32>
    %196 = arith.addf %194, %195 : vector<16x32xf32>
    %c144 = arith.constant 144 : index
    %c0_60 = arith.constant 0 : index
    %197 = vector.load %arg2[%c144, %c0_60] : memref<280x128xf32, #tpu.memory_space<vmem>>, vector<32x96xf32>
    %c176 = arith.constant 176 : index
    %c0_61 = arith.constant 0 : index
    %198 = vector.load %arg2[%c176, %c0_61] : memref<280x128xf32, #tpu.memory_space<vmem>>, vector<32x32xf32>
    %c208 = arith.constant 208 : index
    %c0_62 = arith.constant 0 : index
    %199 = vector.load %arg2[%c208, %c0_62] : memref<280x128xf32, #tpu.memory_space<vmem>>, vector<32x128xf32>
    %c240 = arith.constant 240 : index
    %c0_63 = arith.constant 0 : index
    %200 = vector.load %arg2[%c240, %c0_63] : memref<280x128xf32, #tpu.memory_space<vmem>>, vector<32x128xf32>
    %c272 = arith.constant 272 : index
    %c0_64 = arith.constant 0 : index
    %201 = vector.load %arg2[%c272, %c0_64] : memref<280x128xf32, #tpu.memory_space<vmem>>, vector<1x96xf32>
    %c273 = arith.constant 273 : index
    %c0_65 = arith.constant 0 : index
    %202 = vector.load %arg2[%c273, %c0_65] : memref<280x128xf32, #tpu.memory_space<vmem>>, vector<1x32xf32>
    %c274 = arith.constant 274 : index
    %c0_66 = arith.constant 0 : index
    %203 = vector.load %arg2[%c274, %c0_66] : memref<280x128xf32, #tpu.memory_space<vmem>>, vector<1x128xf32>
    %c275 = arith.constant 275 : index
    %c0_67 = arith.constant 0 : index
    %204 = vector.load %arg2[%c275, %c0_67] : memref<280x128xf32, #tpu.memory_space<vmem>>, vector<1x32xf32>
    %c276 = arith.constant 276 : index
    %c0_68 = arith.constant 0 : index
    %205 = vector.load %arg2[%c276, %c0_68] : memref<280x128xf32, #tpu.memory_space<vmem>>, vector<1x32xf32>
    %c277 = arith.constant 277 : index
    %c0_69 = arith.constant 0 : index
    %206 = vector.load %arg2[%c277, %c0_69] : memref<280x128xf32, #tpu.memory_space<vmem>>, vector<1x32xf32>
    %c278 = arith.constant 278 : index
    %c0_70 = arith.constant 0 : index
    %207 = vector.load %arg2[%c278, %c0_70] : memref<280x128xf32, #tpu.memory_space<vmem>>, vector<1x32xf32>
    %c279 = arith.constant 279 : index
    %c0_71 = arith.constant 0 : index
    %208 = vector.load %arg2[%c279, %c0_71] : memref<280x128xf32, #tpu.memory_space<vmem>>, vector<1x32xf32>
    %cst_72 = arith.constant dense<0.000000e+00> : vector<16x96xf32>
    %209 = tpu.matmul %196, %197, %cst_72 {dimension_numbers = #tpu.dot_dimension_numbers<[1], [0], [0], [1], [0, 0, 1, 1], [], []>} : vector<16x32xf32>, vector<32x96xf32>, vector<16x96xf32> -> vector<16x96xf32>
    %210 = vector.broadcast %201 : vector<1x96xf32> to vector<16x96xf32>
    %211 = arith.addf %209, %210 : vector<16x96xf32>
    %212 = vector.extract_strided_slice %211 {offsets = [0, 0], sizes = [16, 8], strides = [1, 1]} : vector<16x96xf32> to vector<16x8xf32>
    %213 = vector.shape_cast %212 : vector<16x8xf32> to vector<2x8x8xf32>
    %214 = vector.extract_strided_slice %211 {offsets = [0, 32], sizes = [16, 8], strides = [1, 1]} : vector<16x96xf32> to vector<16x8xf32>
    %215 = vector.shape_cast %214 : vector<16x8xf32> to vector<2x8x8xf32>
    %216 = vector.extract_strided_slice %211 {offsets = [0, 64], sizes = [16, 8], strides = [1, 1]} : vector<16x96xf32> to vector<16x8xf32>
    %217 = vector.shape_cast %216 : vector<16x8xf32> to vector<2x8x8xf32>
    "tpu.trace_start"() <{level = 10 : i32, message = "bqd,bkd->bqk"}> : () -> ()
    %cst_73 = arith.constant dense<0.000000e+00> : vector<2x8x8xf32>
    %218 = tpu.matmul %213, %215, %cst_73 {dimension_numbers = #tpu.dot_dimension_numbers<[2], [2], [1], [1], [0, 0, 0, 1, 1, 1], [0], [0]>} : vector<2x8x8xf32>, vector<2x8x8xf32>, vector<2x8x8xf32> -> vector<2x8x8xf32>
    "tpu.trace_stop"() : () -> ()
    %cst_74 = arith.constant 0.353553385 : f32
    %219 = vector.broadcast %cst_74 : f32 to vector<2x8x8xf32>
    %220 = arith.mulf %218, %219 : vector<2x8x8xf32>
    %221 = vector.broadcast %25 : vector<2x1x8xf32> to vector<2x8x8xf32>
    %222 = arith.addf %220, %221 : vector<2x8x8xf32>
    %cst_75 = arith.constant dense<0xFF800000> : vector<2x8xf32>
    %223 = vector.multi_reduction <maximumf>, %222, %cst_75 [2] : vector<2x8x8xf32> to vector<2x8xf32>
    %224 = vector.shape_cast %223 : vector<2x8xf32> to vector<2x8x1xf32>
    %225 = vector.broadcast %224 : vector<2x8x1xf32> to vector<2x8x8xf32>
    %226 = arith.subf %222, %225 : vector<2x8x8xf32>
    %227 = math.exp %226 : vector<2x8x8xf32>
    %cst_76 = arith.constant dense<0.000000e+00> : vector<2x8xf32>
    %228 = vector.multi_reduction <add>, %227, %cst_76 [2] : vector<2x8x8xf32> to vector<2x8xf32>
    %229 = vector.shape_cast %228 : vector<2x8xf32> to vector<2x8x1xf32>
    %230 = tpu.reciprocal %229 {approx = true} : vector<2x8x1xf32> -> vector<2x8x1xf32>
    %231 = vector.broadcast %230 : vector<2x8x1xf32> to vector<2x8x8xf32>
    %232 = arith.mulf %227, %231 : vector<2x8x8xf32>
    "tpu.trace_start"() <{level = 10 : i32, message = "bqk,bkd->bqd"}> : () -> ()
    %cst_77 = arith.constant dense<0.000000e+00> : vector<2x8x8xf32>
    %233 = tpu.matmul %232, %217, %cst_77 {dimension_numbers = #tpu.dot_dimension_numbers<[2], [1], [1], [2], [0, 0, 0, 1, 1, 2], [0], [0]>} : vector<2x8x8xf32>, vector<2x8x8xf32>, vector<2x8x8xf32> -> vector<2x8x8xf32>
    "tpu.trace_stop"() : () -> ()
    %234 = vector.shape_cast %233 : vector<2x8x8xf32> to vector<16x8xf32>
    %235 = vector.extract_strided_slice %211 {offsets = [0, 8], sizes = [16, 8], strides = [1, 1]} : vector<16x96xf32> to vector<16x8xf32>
    %236 = vector.shape_cast %235 : vector<16x8xf32> to vector<2x8x8xf32>
    %237 = vector.extract_strided_slice %211 {offsets = [0, 40], sizes = [16, 8], strides = [1, 1]} : vector<16x96xf32> to vector<16x8xf32>
    %238 = vector.shape_cast %237 : vector<16x8xf32> to vector<2x8x8xf32>
    %239 = vector.extract_strided_slice %211 {offsets = [0, 72], sizes = [16, 8], strides = [1, 1]} : vector<16x96xf32> to vector<16x8xf32>
    %240 = vector.shape_cast %239 : vector<16x8xf32> to vector<2x8x8xf32>
    "tpu.trace_start"() <{level = 10 : i32, message = "bqd,bkd->bqk"}> : () -> ()
    %cst_78 = arith.constant dense<0.000000e+00> : vector<2x8x8xf32>
    %241 = tpu.matmul %236, %238, %cst_78 {dimension_numbers = #tpu.dot_dimension_numbers<[2], [2], [1], [1], [0, 0, 0, 1, 1, 1], [0], [0]>} : vector<2x8x8xf32>, vector<2x8x8xf32>, vector<2x8x8xf32> -> vector<2x8x8xf32>
    "tpu.trace_stop"() : () -> ()
    %cst_79 = arith.constant 0.353553385 : f32
    %242 = vector.broadcast %cst_79 : f32 to vector<2x8x8xf32>
    %243 = arith.mulf %241, %242 : vector<2x8x8xf32>
    %244 = vector.broadcast %25 : vector<2x1x8xf32> to vector<2x8x8xf32>
    %245 = arith.addf %243, %244 : vector<2x8x8xf32>
    %cst_80 = arith.constant dense<0xFF800000> : vector<2x8xf32>
    %246 = vector.multi_reduction <maximumf>, %245, %cst_80 [2] : vector<2x8x8xf32> to vector<2x8xf32>
    %247 = vector.shape_cast %246 : vector<2x8xf32> to vector<2x8x1xf32>
    %248 = vector.broadcast %247 : vector<2x8x1xf32> to vector<2x8x8xf32>
    %249 = arith.subf %245, %248 : vector<2x8x8xf32>
    %250 = math.exp %249 : vector<2x8x8xf32>
    %cst_81 = arith.constant dense<0.000000e+00> : vector<2x8xf32>
    %251 = vector.multi_reduction <add>, %250, %cst_81 [2] : vector<2x8x8xf32> to vector<2x8xf32>
    %252 = vector.shape_cast %251 : vector<2x8xf32> to vector<2x8x1xf32>
    %253 = tpu.reciprocal %252 {approx = true} : vector<2x8x1xf32> -> vector<2x8x1xf32>
    %254 = vector.broadcast %253 : vector<2x8x1xf32> to vector<2x8x8xf32>
    %255 = arith.mulf %250, %254 : vector<2x8x8xf32>
    "tpu.trace_start"() <{level = 10 : i32, message = "bqk,bkd->bqd"}> : () -> ()
    %cst_82 = arith.constant dense<0.000000e+00> : vector<2x8x8xf32>
    %256 = tpu.matmul %255, %240, %cst_82 {dimension_numbers = #tpu.dot_dimension_numbers<[2], [1], [1], [2], [0, 0, 0, 1, 1, 2], [0], [0]>} : vector<2x8x8xf32>, vector<2x8x8xf32>, vector<2x8x8xf32> -> vector<2x8x8xf32>
    "tpu.trace_stop"() : () -> ()
    %257 = vector.shape_cast %256 : vector<2x8x8xf32> to vector<16x8xf32>
    %258 = vector.extract_strided_slice %211 {offsets = [0, 16], sizes = [16, 8], strides = [1, 1]} : vector<16x96xf32> to vector<16x8xf32>
    %259 = vector.shape_cast %258 : vector<16x8xf32> to vector<2x8x8xf32>
    %260 = vector.extract_strided_slice %211 {offsets = [0, 48], sizes = [16, 8], strides = [1, 1]} : vector<16x96xf32> to vector<16x8xf32>
    %261 = vector.shape_cast %260 : vector<16x8xf32> to vector<2x8x8xf32>
    %262 = vector.extract_strided_slice %211 {offsets = [0, 80], sizes = [16, 8], strides = [1, 1]} : vector<16x96xf32> to vector<16x8xf32>
    %263 = vector.shape_cast %262 : vector<16x8xf32> to vector<2x8x8xf32>
    "tpu.trace_start"() <{level = 10 : i32, message = "bqd,bkd->bqk"}> : () -> ()
    %cst_83 = arith.constant dense<0.000000e+00> : vector<2x8x8xf32>
    %264 = tpu.matmul %259, %261, %cst_83 {dimension_numbers = #tpu.dot_dimension_numbers<[2], [2], [1], [1], [0, 0, 0, 1, 1, 1], [0], [0]>} : vector<2x8x8xf32>, vector<2x8x8xf32>, vector<2x8x8xf32> -> vector<2x8x8xf32>
    "tpu.trace_stop"() : () -> ()
    %cst_84 = arith.constant 0.353553385 : f32
    %265 = vector.broadcast %cst_84 : f32 to vector<2x8x8xf32>
    %266 = arith.mulf %264, %265 : vector<2x8x8xf32>
    %267 = vector.broadcast %25 : vector<2x1x8xf32> to vector<2x8x8xf32>
    %268 = arith.addf %266, %267 : vector<2x8x8xf32>
    %cst_85 = arith.constant dense<0xFF800000> : vector<2x8xf32>
    %269 = vector.multi_reduction <maximumf>, %268, %cst_85 [2] : vector<2x8x8xf32> to vector<2x8xf32>
    %270 = vector.shape_cast %269 : vector<2x8xf32> to vector<2x8x1xf32>
    %271 = vector.broadcast %270 : vector<2x8x1xf32> to vector<2x8x8xf32>
    %272 = arith.subf %268, %271 : vector<2x8x8xf32>
    %273 = math.exp %272 : vector<2x8x8xf32>
    %cst_86 = arith.constant dense<0.000000e+00> : vector<2x8xf32>
    %274 = vector.multi_reduction <add>, %273, %cst_86 [2] : vector<2x8x8xf32> to vector<2x8xf32>
    %275 = vector.shape_cast %274 : vector<2x8xf32> to vector<2x8x1xf32>
    %276 = tpu.reciprocal %275 {approx = true} : vector<2x8x1xf32> -> vector<2x8x1xf32>
    %277 = vector.broadcast %276 : vector<2x8x1xf32> to vector<2x8x8xf32>
    %278 = arith.mulf %273, %277 : vector<2x8x8xf32>
    "tpu.trace_start"() <{level = 10 : i32, message = "bqk,bkd->bqd"}> : () -> ()
    %cst_87 = arith.constant dense<0.000000e+00> : vector<2x8x8xf32>
    %279 = tpu.matmul %278, %263, %cst_87 {dimension_numbers = #tpu.dot_dimension_numbers<[2], [1], [1], [2], [0, 0, 0, 1, 1, 2], [0], [0]>} : vector<2x8x8xf32>, vector<2x8x8xf32>, vector<2x8x8xf32> -> vector<2x8x8xf32>
    "tpu.trace_stop"() : () -> ()
    %280 = vector.shape_cast %279 : vector<2x8x8xf32> to vector<16x8xf32>
    %281 = vector.extract_strided_slice %211 {offsets = [0, 24], sizes = [16, 8], strides = [1, 1]} : vector<16x96xf32> to vector<16x8xf32>
    %282 = vector.shape_cast %281 : vector<16x8xf32> to vector<2x8x8xf32>
    %283 = vector.extract_strided_slice %211 {offsets = [0, 56], sizes = [16, 8], strides = [1, 1]} : vector<16x96xf32> to vector<16x8xf32>
    %284 = vector.shape_cast %283 : vector<16x8xf32> to vector<2x8x8xf32>
    %285 = vector.extract_strided_slice %211 {offsets = [0, 88], sizes = [16, 8], strides = [1, 1]} : vector<16x96xf32> to vector<16x8xf32>
    %286 = vector.shape_cast %285 : vector<16x8xf32> to vector<2x8x8xf32>
    "tpu.trace_start"() <{level = 10 : i32, message = "bqd,bkd->bqk"}> : () -> ()
    %cst_88 = arith.constant dense<0.000000e+00> : vector<2x8x8xf32>
    %287 = tpu.matmul %282, %284, %cst_88 {dimension_numbers = #tpu.dot_dimension_numbers<[2], [2], [1], [1], [0, 0, 0, 1, 1, 1], [0], [0]>} : vector<2x8x8xf32>, vector<2x8x8xf32>, vector<2x8x8xf32> -> vector<2x8x8xf32>
    "tpu.trace_stop"() : () -> ()
    %cst_89 = arith.constant 0.353553385 : f32
    %288 = vector.broadcast %cst_89 : f32 to vector<2x8x8xf32>
    %289 = arith.mulf %287, %288 : vector<2x8x8xf32>
    %290 = vector.broadcast %25 : vector<2x1x8xf32> to vector<2x8x8xf32>
    %291 = arith.addf %289, %290 : vector<2x8x8xf32>
    %cst_90 = arith.constant dense<0xFF800000> : vector<2x8xf32>
    %292 = vector.multi_reduction <maximumf>, %291, %cst_90 [2] : vector<2x8x8xf32> to vector<2x8xf32>
    %293 = vector.shape_cast %292 : vector<2x8xf32> to vector<2x8x1xf32>
    %294 = vector.broadcast %293 : vector<2x8x1xf32> to vector<2x8x8xf32>
    %295 = arith.subf %291, %294 : vector<2x8x8xf32>
    %296 = math.exp %295 : vector<2x8x8xf32>
    %cst_91 = arith.constant dense<0.000000e+00> : vector<2x8xf32>
    %297 = vector.multi_reduction <add>, %296, %cst_91 [2] : vector<2x8x8xf32> to vector<2x8xf32>
    %298 = vector.shape_cast %297 : vector<2x8xf32> to vector<2x8x1xf32>
    %299 = tpu.reciprocal %298 {approx = true} : vector<2x8x1xf32> -> vector<2x8x1xf32>
    %300 = vector.broadcast %299 : vector<2x8x1xf32> to vector<2x8x8xf32>
    %301 = arith.mulf %296, %300 : vector<2x8x8xf32>
    "tpu.trace_start"() <{level = 10 : i32, message = "bqk,bkd->bqd"}> : () -> ()
    %cst_92 = arith.constant dense<0.000000e+00> : vector<2x8x8xf32>
    %302 = tpu.matmul %301, %286, %cst_92 {dimension_numbers = #tpu.dot_dimension_numbers<[2], [1], [1], [2], [0, 0, 0, 1, 1, 2], [0], [0]>} : vector<2x8x8xf32>, vector<2x8x8xf32>, vector<2x8x8xf32> -> vector<2x8x8xf32>
    "tpu.trace_stop"() : () -> ()
    %303 = vector.shape_cast %302 : vector<2x8x8xf32> to vector<16x8xf32>
    %304 = tpu.concatenate %234, %257, %280, %303 in 1 : vector<16x8xf32>, vector<16x8xf32>, vector<16x8xf32>, vector<16x8xf32> -> vector<16x32xf32>
    %cst_93 = arith.constant dense<0.000000e+00> : vector<16x32xf32>
    %305 = tpu.matmul %304, %198, %cst_93 {dimension_numbers = #tpu.dot_dimension_numbers<[1], [0], [0], [1], [0, 0, 1, 1], [], []>} : vector<16x32xf32>, vector<32x32xf32>, vector<16x32xf32> -> vector<16x32xf32>
    %306 = vector.broadcast %202 : vector<1x32xf32> to vector<16x32xf32>
    %307 = arith.addf %305, %306 : vector<16x32xf32>
    %308 = arith.addf %196, %307 : vector<16x32xf32>
    %cst_94 = arith.constant dense<0.000000e+00> : vector<16xf32>
    %309 = vector.multi_reduction <add>, %308, %cst_94 [1] : vector<16x32xf32> to vector<16xf32>
    %310 = vector.shape_cast %309 : vector<16xf32> to vector<16x1xf32>
    %cst_95 = arith.constant 3.200000e+01 : f32
    %311 = vector.broadcast %cst_95 : f32 to vector<16x1xf32>
    %312 = arith.divf %310, %311 : vector<16x1xf32>
    %313 = vector.broadcast %312 : vector<16x1xf32> to vector<16x32xf32>
    %314 = arith.subf %308, %313 : vector<16x32xf32>
    %315 = arith.mulf %314, %314 : vector<16x32xf32>
    %cst_96 = arith.constant dense<0.000000e+00> : vector<16xf32>
    %316 = vector.multi_reduction <add>, %315, %cst_96 [1] : vector<16x32xf32> to vector<16xf32>
    %317 = vector.shape_cast %316 : vector<16xf32> to vector<16x1xf32>
    %cst_97 = arith.constant 3.200000e+01 : f32
    %318 = vector.broadcast %cst_97 : f32 to vector<16x1xf32>
    %319 = arith.divf %317, %318 : vector<16x1xf32>
    %320 = vector.broadcast %312 : vector<16x1xf32> to vector<16x32xf32>
    %321 = arith.subf %308, %320 : vector<16x32xf32>
    %cst_98 = arith.constant 9.99999996E-13 : f32
    %322 = vector.broadcast %cst_98 : f32 to vector<16x1xf32>
    %323 = arith.addf %319, %322 : vector<16x1xf32>
    %324 = math.rsqrt %323 : vector<16x1xf32>
    %325 = vector.broadcast %324 : vector<16x1xf32> to vector<16x32xf32>
    %326 = arith.mulf %321, %325 : vector<16x32xf32>
    %327 = vector.broadcast %205 : vector<1x32xf32> to vector<16x32xf32>
    %328 = arith.mulf %326, %327 : vector<16x32xf32>
    %329 = vector.broadcast %206 : vector<1x32xf32> to vector<16x32xf32>
    %330 = arith.addf %328, %329 : vector<16x32xf32>
    %cst_99 = arith.constant dense<0.000000e+00> : vector<16x128xf32>
    %331 = tpu.matmul %330, %199, %cst_99 {dimension_numbers = #tpu.dot_dimension_numbers<[1], [0], [0], [1], [0, 0, 1, 1], [], []>} : vector<16x32xf32>, vector<32x128xf32>, vector<16x128xf32> -> vector<16x128xf32>
    %332 = vector.broadcast %203 : vector<1x128xf32> to vector<16x128xf32>
    %333 = arith.addf %331, %332 : vector<16x128xf32>
    %cst_100 = arith.constant 5.000000e-01 : f32
    %334 = vector.broadcast %cst_100 : f32 to vector<16x128xf32>
    %335 = arith.mulf %334, %333 : vector<16x128xf32>
    %cst_101 = arith.constant 0.707106769 : f32
    %336 = vector.broadcast %cst_101 : f32 to vector<16x128xf32>
    %337 = arith.mulf %333, %336 : vector<16x128xf32>
    %338 = math.erf %337 : vector<16x128xf32>
    %cst_102 = arith.constant 1.000000e+00 : f32
    %339 = vector.broadcast %cst_102 : f32 to vector<16x128xf32>
    %340 = arith.addf %339, %338 : vector<16x128xf32>
    %341 = arith.mulf %335, %340 : vector<16x128xf32>
    %cst_103 = arith.constant dense<0.000000e+00> : vector<16x32xf32>
    %342 = tpu.matmul %341, %200, %cst_103 {dimension_numbers = #tpu.dot_dimension_numbers<[1], [1], [0], [0], [0, 0, 1, 0], [], []>} : vector<16x128xf32>, vector<32x128xf32>, vector<16x32xf32> -> vector<16x32xf32>
    %343 = vector.broadcast %204 : vector<1x32xf32> to vector<16x32xf32>
    %344 = arith.addf %342, %343 : vector<16x32xf32>
    %345 = arith.addf %330, %344 : vector<16x32xf32>
    %cst_104 = arith.constant dense<0.000000e+00> : vector<16xf32>
    %346 = vector.multi_reduction <add>, %345, %cst_104 [1] : vector<16x32xf32> to vector<16xf32>
    %347 = vector.shape_cast %346 : vector<16xf32> to vector<16x1xf32>
    %cst_105 = arith.constant 3.200000e+01 : f32
    %348 = vector.broadcast %cst_105 : f32 to vector<16x1xf32>
    %349 = arith.divf %347, %348 : vector<16x1xf32>
    %350 = vector.broadcast %349 : vector<16x1xf32> to vector<16x32xf32>
    %351 = arith.subf %345, %350 : vector<16x32xf32>
    %352 = arith.mulf %351, %351 : vector<16x32xf32>
    %cst_106 = arith.constant dense<0.000000e+00> : vector<16xf32>
    %353 = vector.multi_reduction <add>, %352, %cst_106 [1] : vector<16x32xf32> to vector<16xf32>
    %354 = vector.shape_cast %353 : vector<16xf32> to vector<16x1xf32>
    %cst_107 = arith.constant 3.200000e+01 : f32
    %355 = vector.broadcast %cst_107 : f32 to vector<16x1xf32>
    %356 = arith.divf %354, %355 : vector<16x1xf32>
    %357 = vector.broadcast %349 : vector<16x1xf32> to vector<16x32xf32>
    %358 = arith.subf %345, %357 : vector<16x32xf32>
    %cst_108 = arith.constant 9.99999996E-13 : f32
    %359 = vector.broadcast %cst_108 : f32 to vector<16x1xf32>
    %360 = arith.addf %356, %359 : vector<16x1xf32>
    %361 = math.rsqrt %360 : vector<16x1xf32>
    %362 = vector.broadcast %361 : vector<16x1xf32> to vector<16x32xf32>
    %363 = arith.mulf %358, %362 : vector<16x32xf32>
    %364 = vector.broadcast %207 : vector<1x32xf32> to vector<16x32xf32>
    %365 = arith.mulf %363, %364 : vector<16x32xf32>
    %366 = vector.broadcast %208 : vector<1x32xf32> to vector<16x32xf32>
    %367 = arith.addf %365, %366 : vector<16x32xf32>
    %c0_109 = arith.constant 0 : index
    %c0_110 = arith.constant 0 : index
    %368 = vector.load %arg3[%c0_109, %c0_110] : memref<16x32xf32, #tpu.memory_space<vmem>>, vector<16x32xf32>
    tpu.vector_store %arg3[%c0_109, %c0_110], %367 {strides = array<i32>} : memref<16x32xf32, #tpu.memory_space<vmem>>, vector<16x32xf32>,
    return
  }
}

</mosaic_0001>

<llo_original>
// kernel: tpu_custom_call.1
$region0: #{tpu_custom_call.1}
  #allocation0 [shape = 'u32[]', space=smem, size = 0x4, offset = 0x4, fixed_abs, tag = 'smem constant byte address 0x4 - core index']
  #allocation1 [shape = 'u32[72,128]{1,0:T(1,128)}', space=vmem, size = 0x9000, scoped, tag = 'internal scratch']
  %s0 = inlined_call_operand.hbm [shape: f32[16,32], index: 0, kind: input, shape index: {}]
  %s1 = inlined_call_operand.hbm [shape: f32[2,1,8], index: 1, kind: input, shape index: {}]
  %s2 = inlined_call_operand.hbm [shape: f32[280,128], index: 2, kind: input, shape index: {}]
  %s3 = inlined_call_operand.hbm [shape: f32[16,32], index: 3, kind: output, shape index: {}]
  %s4 = sld [smem:[#allocation0]]
  $region34: #{tpu_custom_call.1} parent=0
    _
  %s6 = ssub.s32 1, %s4
  %s7 = scalar_select 0, %s6, %s4
  $region1: #{tpu_custom_call.1} parent=0
    #allocation2 [shape = 'u8[8192]{0}', space=vmem, size = 0x2000, scoped, tag = 'input window, operand 0, single buffered']
    #allocation3 [shape = 's32[1]{0}', space=sflag, size = 0x4, scoped, tag = 'scoped memory for tpu_custom_call.1']
    #allocation4 [shape = 's32[1]{0}', space=sflag, size = 0x4, scoped, tag = 'scoped memory for tpu_custom_call.1']
    #allocation5 [shape = 'u8[1024]{0}', space=vmem, size = 0x400, scoped, tag = 'input window, operand 1, single buffered']
    #allocation6 [shape = 's32[1]{0}', space=sflag, size = 0x4, scoped, tag = 'scoped memory for tpu_custom_call.1']
    #allocation7 [shape = 'u8[143360]{0}', space=vmem, size = 0x23000, scoped, tag = 'input window, operand 2, single buffered']
    #allocation8 [shape = 'u8[8192]{0}', space=vmem, size = 0x2000, scoped, tag = 'output window, operand 0, single buffered']
    %8 = vsyncpa [#allocation3], 0
    %9 = vsyncpa [#allocation6], 0
    %10 = vsyncpa [#allocation4], 0
    // Predicated region
    $region2: #{tpu_custom_call.1} parent=1 // pred_check
      _
    $region3: #{tpu_custom_call.1} parent=1 // pred_check_branch
      %12 = sbr.rel (0) target = $region5
    $region4: #{tpu_custom_call.1} parent=1 // pred_region
      %14 = vsyncadd [#allocation3], 0
      %s15 = sshll.u32 %s0, 4
      %s16 = int_to_ptr.hbm [resolvable:$true] %s15
      %s17 = sshll.u32 [#allocation2], 4
      %s18 = int_to_ptr.vmem [resolvable:$true] %s17
      %23 = dma.hbm_to_vmem [thread:$0]  %s16, 256, %s18, [#allocation3], 128, 128, 8
    $region5: #{tpu_custom_call.1} parent=1 // pred_fallthru
      _
    // Predicated region
    $region6: #{tpu_custom_call.1} parent=1 // pred_check
      _
    $region7: #{tpu_custom_call.1} parent=1 // pred_check_branch
      %25 = sbr.rel (0) target = $region9
    $region8: #{tpu_custom_call.1} parent=1 // pred_region
      %27 = vsyncadd [#allocation6], 0
      %s28 = sshll.u32 %s1, 4
      %s29 = int_to_ptr.hbm [resolvable:$true] %s28
      %s30 = sshll.u32 [#allocation5], 4
      %s31 = int_to_ptr.vmem [resolvable:$true] %s30
      %36 = dma.hbm_to_vmem [thread:$0]  %s29, 32, %s31, [#allocation6], 16, 16, 1
    $region9: #{tpu_custom_call.1} parent=1 // pred_fallthru
      _
    // Predicated region
    $region10: #{tpu_custom_call.1} parent=1 // pred_check
      _
    $region11: #{tpu_custom_call.1} parent=1 // pred_check_branch
      %38 = sbr.rel (0) target = $region13
    $region12: #{tpu_custom_call.1} parent=1 // pred_region
      %40 = vsyncadd [#allocation6], 0
      %s41 = sshll.u32 %s2, 4
      %s42 = int_to_ptr.hbm [resolvable:$true] %s41
      %s43 = sshll.u32 [#allocation7], 4
      %s44 = int_to_ptr.vmem [resolvable:$true] %s43
      %49 = dma.hbm_to_vmem [thread:$0]  %s42, 4480, %s44, [#allocation6], 128, 128, 8
    $region13: #{tpu_custom_call.1} parent=1 // pred_fallthru
      _
    // Predicated region
    $region14: #{tpu_custom_call.1} parent=1 // pred_check
      _
    $region15: #{tpu_custom_call.1} parent=1 // pred_check_branch
      %51 = sbr.rel (0) target = $region17
    $region16: #{tpu_custom_call.1} parent=1 // pred_region
      %53 = dma.done [#allocation3], 256
    $region17: #{tpu_custom_call.1} parent=1 // pred_fallthru
      _
    // Predicated region
    $region18: #{tpu_custom_call.1} parent=1 // pred_check
      _
    $region19: #{tpu_custom_call.1} parent=1 // pred_check_branch
      %55 = sbr.rel (0) target = $region21
    $region20: #{tpu_custom_call.1} parent=1 // pred_region
      %57 = dma.done [#allocation6], 32
    $region21: #{tpu_custom_call.1} parent=1 // pred_fallthru
      _
    // Predicated region
    $region22: #{tpu_custom_call.1} parent=1 // pred_check
      _
    $region23: #{tpu_custom_call.1} parent=1 // pred_check_branch
      %59 = sbr.rel (0) target = $region25
    $region24: #{tpu_custom_call.1} parent=1 // pred_region
      %61 = dma.done [#allocation6], 4480
    $region25: #{tpu_custom_call.1} parent=1 // pred_fallthru
      _
    %v62 = vld [vmem:[#allocation2] sm:$0xff]
    %v63 = vld [vmem:[#allocation2 + $0x8] sm:$0xff]
    %v64 = vld [vmem:[#allocation7] sm:$0x1]
    %v65 = vld [vmem:[#allocation7 + $0x1] sm:$0x1]
    %vm66 = vcmask 261120
    %v67 = vsel %vm66, %v62, 0.0
    %68 = vadd.xlane.f32.xlu0 %v67
    %v69 = vpop.xlane.xlu0 %68
    %v70 = vsel %vm66, %v63, 0.0
    %71 = vadd.xlane.f32.xlu0 %v70
    %v72 = vpop.xlane.xlu0 %71
    %v73 = vrcp.pop 32.0
    %v74 = vmul.f32 32.0, %v73
    %v75 = vsub.f32 1.0, %v74
    %v76 = vmul.f32 %v73, %v75
    %v77 = vadd.f32 %v73, %v76
    %vm78 = vweird.f32 %v73
    %v79 = vsel %vm78, %v73, %v77
    %v80 = vmul.f32 %v69, %v79
    %v81 = vmul.f32 %v72, %v79
    %v82 = vsub.f32 %v62, %v80
    %v83 = vsub.f32 %v63, %v81
    %v84 = vmul.f32 %v82, %v82
    %v85 = vmul.f32 %v83, %v83
    %v86 = vsel %vm66, %v84, 0.0
    %87 = vadd.xlane.f32.xlu0 %v86
    %v88 = vpop.xlane.xlu0 %87
    %v89 = vsel %vm66, %v85, 0.0
    %90 = vadd.xlane.f32.xlu0 %v89
    %v91 = vpop.xlane.xlu0 %90
    %v92 = vmul.f32 %v88, %v79
    %v93 = vmul.f32 %v91, %v79
    %v94 = vadd.f32 %v92, 1e-12
    %v95 = vadd.f32 %v93, 1e-12
    %v96 = vrsqrt.pop %v94
    %v97 = vmul.f32 %v96, %v94
    %v98 = vmul.f32 %v97, %v96
    %v99 = vmul.f32 0.5, %v98
    %v100 = vsub.f32 1.5, %v99
    %v101 = vmul.f32 %v96, %v100
    %vm102 = vweird.f32 %v94
    %vm103 = vweird.f32 %v96
    %vm104 = vmor %vm102, %vm103
    %v105 = vsel %vm104, %v96, %v101
    %v106 = vrsqrt.pop %v95
    %v107 = vmul.f32 %v106, %v95
    %v108 = vmul.f32 %v107, %v106
    %v109 = vmul.f32 0.5, %v108
    %v110 = vsub.f32 1.5, %v109
    %v111 = vmul.f32 %v106, %v110
    %vm112 = vweird.f32 %v95
    %vm113 = vweird.f32 %v106
    %vm114 = vmor %vm112, %vm113
    %v115 = vsel %vm114, %v106, %v111
    %v116 = vmul.f32 %v82, %v105
    %v117 = vmul.f32 %v83, %v115
    %v118 = vperm.slane %v64, 0
    %v119 = vmul.f32 %v116, %v118
    %v120 = vmul.f32 %v117, %v118
    %v121 = vperm.slane %v65, 0
    %v122 = vadd.f32 %v119, %v121
    %v123 = vadd.f32 %v120, %v121
    %v124 = vld [vmem:[#allocation5] sm:$0x1]
    %v125 = vld [vmem:[#allocation5 + $0x1] sm:$0x1]
    %v126 = vld [vmem:[#allocation7 + $0x8] sm:$0xff]
    %v127 = vld [vmem:[#allocation7 + $0x10] sm:$0xff]
    %v128 = vld [vmem:[#allocation7 + $0x18] sm:$0xff]
    %v129 = vld [vmem:[#allocation7 + $0x20] sm:$0xff]
    %v130 = vld [vmem:[#allocation7 + $0x28] sm:$0xff]
    %v131 = vld [vmem:[#allocation7 + $0x30] sm:$0xff]
    %v132 = vld [vmem:[#allocation7 + $0x38] sm:$0xff]
    %v133 = vld [vmem:[#allocation7 + $0x40] sm:$0xff]
    %v134 = vld [vmem:[#allocation7 + $0x48] sm:$0xff]
    %v135 = vld [vmem:[#allocation7 + $0x50] sm:$0xff]
    %v136 = vld [vmem:[#allocation7 + $0x58] sm:$0xff]
    %v137 = vld [vmem:[#allocation7 + $0x60] sm:$0xff]
    %v138 = vld [vmem:[#allocation7 + $0x68] sm:$0xff]
    %v139 = vld [vmem:[#allocation7 + $0x70] sm:$0xff]
    %v140 = vld [vmem:[#allocation7 + $0x78] sm:$0xff]
    %v141 = vld [vmem:[#allocation7 + $0x80] sm:$0xff]
    %v142 = vld [vmem:[#allocation7 + $0x88] sm:$0x1]
    %v143 = vld [vmem:[#allocation7 + $0x89] sm:$0x1]
    %v144 = vld [vmem:[#allocation7 + $0x8a] sm:$0x1]
    %v145 = vld [vmem:[#allocation7 + $0x8b] sm:$0x1]
    %v146 = vld [vmem:[#allocation7 + $0x8c] sm:$0x1]
    %v147 = vld [vmem:[#allocation7 + $0x8d] sm:$0x1]
    %v148 = vld [vmem:[#allocation7 + $0x8e] sm:$0x1]
    %v149 = vld [vmem:[#allocation7 + $0x8f] sm:$0x1]
    %v150 = vperm.slane %v142, 0
    %v152 = vsel %vm66, %v122, 0
    %v155 = vsel %vm66, %v123, 0
    %157 = vmatpush.msra.mxu0 0.0
    %158 = vmatpush.msra.mxu0 0.0
    %159 = vmatpush.msra.mxu0 0.0
    %160 = vmatpush.msra.mxu0 0.0
    %161 = vmatpush.msra.mxu0 0.0
    %162 = vmatpush.msra.mxu0 0.0
    %163 = vmatpush.msra.mxu0 0.0
    %164 = vmatpush.msra.mxu0 0.0
    %165 = vmatpush.msra.mxu0 0.0
    %166 = vmatpush.msra.mxu0 0.0
    %167 = vmatpush.msra.mxu0 0.0
    %168 = vmatpush.msra.mxu0 0.0
    %169 = vmatpush.msra.mxu0 %v129
    %170 = vmatpush.msra.mxu0 %v128
    %171 = vmatpush.msra.mxu0 %v127
    %172 = vmatpush.msra.mxu0 %v126
    %173 = vmatmul.f32.gmra.mxu0 %v152
    %v174 = vpop.f32.mrf.mxu0
    %v175 = vadd.f32 %v150, %v174
    %176 = vmatmul.f32.gmra.mxu0 %v155
    %v177 = vpop.f32.mrf.mxu0
    %v178 = vadd.f32 %v150, %v177
    %179 = vdwg.mxu0
    %181 = vrot.lane.b32.xlu0 %v175, 96
    %v182 = vpop.permute.xlu0 %181
    %vm183 = vcmask 64512
    %v184 = vsel %vm183, %v175, 0
    %v186 = vsel %vm183, %v182, 0
    %188 = vmatpush.xpose.msra.mxu0 0.0
    %189 = vmatpush.xpose.msra.mxu0 0.0
    %190 = vmatpush.xpose.msra.mxu0 0.0
    %191 = vmatpush.xpose.msra.mxu0 0.0
    %192 = vmatpush.xpose.msra.mxu0 0.0
    %193 = vmatpush.xpose.msra.mxu0 0.0
    %194 = vmatpush.xpose.msra.mxu0 0.0
    %195 = vmatpush.xpose.msra.mxu0 0.0
    %196 = vmatpush.xpose.msra.mxu0 0.0
    %197 = vmatpush.xpose.msra.mxu0 0.0
    %198 = vmatpush.xpose.msra.mxu0 0.0
    %199 = vmatpush.xpose.msra.mxu0 0.0
    %200 = vmatpush.xpose.msra.mxu0 0.0
    %201 = vmatpush.xpose.msra.mxu0 0.0
    %202 = vmatpush.xpose.msra.mxu0 0.0
    %203 = vmatpush.xpose.msra.mxu0 %v186
    %204 = vmatmul.f32.gmra.mxu0 %v184
    %v205 = vpop.f32.mrf.mxu0
    %v206 = vadd.f32 0.0, %v205
    %207 = vdwg.mxu0
    %209 = vrot.lane.b32.xlu0 %v178, 96
    %v210 = vpop.permute.xlu0 %209
    %v211 = vsel %vm183, %v178, 0
    %v213 = vsel %vm183, %v210, 0
    %215 = vmatpush.xpose.msra.mxu0 0.0
    %216 = vmatpush.xpose.msra.mxu0 0.0
    %217 = vmatpush.xpose.msra.mxu0 0.0
    %218 = vmatpush.xpose.msra.mxu0 0.0
    %219 = vmatpush.xpose.msra.mxu0 0.0
    %220 = vmatpush.xpose.msra.mxu0 0.0
    %221 = vmatpush.xpose.msra.mxu0 0.0
    %222 = vmatpush.xpose.msra.mxu0 0.0
    %223 = vmatpush.xpose.msra.mxu0 0.0
    %224 = vmatpush.xpose.msra.mxu0 0.0
    %225 = vmatpush.xpose.msra.mxu0 0.0
    %226 = vmatpush.xpose.msra.mxu0 0.0
    %227 = vmatpush.xpose.msra.mxu0 0.0
    %228 = vmatpush.xpose.msra.mxu0 0.0
    %229 = vmatpush.xpose.msra.mxu0 0.0
    %230 = vmatpush.xpose.msra.mxu0 %v213
    %231 = vmatmul.f32.gmra.mxu0 %v211
    %v232 = vpop.f32.mrf.mxu0
    %v233 = vadd.f32 0.0, %v232
    %234 = vdwg.mxu0
    %v235 = vmul.f32 %v206, 0.35355338
    %v236 = vmul.f32 %v233, 0.35355338
    %v239 = vperm.slane %v124, 0
    %v240 = vperm.slane %v125, 0
    %v243 = vadd.f32 %v235, %v239
    %v244 = vadd.f32 %v236, %v240
    %v245 = vsel %vm183, %v243, -inf
    %246 = vmax.xlane.f32.xlu0 %v245
    %v247 = vpop.xlane.xlu0 %246
    %v248 = vsel %vm183, %v244, -inf
    %249 = vmax.xlane.f32.xlu0 %v248
    %v250 = vpop.xlane.xlu0 %249
    %v251 = vsub.f32 %v243, %v247
    %v252 = vsub.f32 %v244, %v250
    %v253 = vmul.f32 %v251, 1.442695
    %v254 = vpow.pop %v253
    %v255 = vmul.f32 %v252, 1.442695
    %v256 = vpow.pop %v255
    %v257 = vsel %vm183, %v254, 0.0
    %258 = vadd.xlane.f32.xlu0 %v257
    %v259 = vpop.xlane.xlu0 %258
    %v260 = vsel %vm183, %v256, 0.0
    %261 = vadd.xlane.f32.xlu0 %v260
    %v262 = vpop.xlane.xlu0 %261
    %v263 = vrcp.pop %v259
    %v264 = vrcp.pop %v262
    %v265 = vmul.f32 %v254, %v263
    %v266 = vmul.f32 %v256, %v264
    %267 = vrot.lane.b32.xlu0 %v175, 64
    %v268 = vpop.permute.xlu0 %267
    %v271 = vsel %vm183, %v265, 0
    %273 = vmatpush.msra.mxu0 0.0
    %274 = vmatpush.msra.mxu0 0.0
    %275 = vmatpush.msra.mxu0 0.0
    %276 = vmatpush.msra.mxu0 0.0
    %277 = vmatpush.msra.mxu0 0.0
    %278 = vmatpush.msra.mxu0 0.0
    %279 = vmatpush.msra.mxu0 0.0
    %280 = vmatpush.msra.mxu0 0.0
    %281 = vmatpush.msra.mxu0 0.0
    %282 = vmatpush.msra.mxu0 0.0
    %283 = vmatpush.msra.mxu0 0.0
    %284 = vmatpush.msra.mxu0 0.0
    %285 = vmatpush.msra.mxu0 0.0
    %286 = vmatpush.msra.mxu0 0.0
    %287 = vmatpush.msra.mxu0 0.0
    %288 = vmatpush.msra.mxu0 %v268
    %289 = vmatmul.f32.gmra.mxu0 %v271
    %v290 = vpop.f32.mrf.mxu0
    %v291 = vadd.f32 0.0, %v290
    %292 = vdwg.mxu0
    %293 = vrot.lane.b32.xlu0 %v178, 64
    %v294 = vpop.permute.xlu0 %293
    %v297 = vsel %vm183, %v266, 0
    %299 = vmatpush.msra.mxu0 0.0
    %300 = vmatpush.msra.mxu0 0.0
    %301 = vmatpush.msra.mxu0 0.0
    %302 = vmatpush.msra.mxu0 0.0
    %303 = vmatpush.msra.mxu0 0.0
    %304 = vmatpush.msra.mxu0 0.0
    %305 = vmatpush.msra.mxu0 0.0
    %306 = vmatpush.msra.mxu0 0.0
    %307 = vmatpush.msra.mxu0 0.0
    %308 = vmatpush.msra.mxu0 0.0
    %309 = vmatpush.msra.mxu0 0.0
    %310 = vmatpush.msra.mxu0 0.0
    %311 = vmatpush.msra.mxu0 0.0
    %312 = vmatpush.msra.mxu0 0.0
    %313 = vmatpush.msra.mxu0 0.0
    %314 = vmatpush.msra.mxu0 %v294
    %315 = vmatmul.f32.gmra.mxu0 %v297
    %v316 = vpop.f32.mrf.mxu0
    %v317 = vadd.f32 0.0, %v316
    %318 = vdwg.mxu0
    %319 = vrot.lane.b32.xlu0 %v175, 120
    %v320 = vpop.permute.xlu0 %319
    %321 = vrot.lane.b32.xlu0 %v175, 88
    %v322 = vpop.permute.xlu0 %321
    %v323 = vsel %vm183, %v320, 0
    %v325 = vsel %vm183, %v322, 0
    %327 = vmatpush.xpose.msra.mxu0 0.0
    %328 = vmatpush.xpose.msra.mxu0 0.0
    %329 = vmatpush.xpose.msra.mxu0 0.0
    %330 = vmatpush.xpose.msra.mxu0 0.0
    %331 = vmatpush.xpose.msra.mxu0 0.0
    %332 = vmatpush.xpose.msra.mxu0 0.0
    %333 = vmatpush.xpose.msra.mxu0 0.0
    %334 = vmatpush.xpose.msra.mxu0 0.0
    %335 = vmatpush.xpose.msra.mxu0 0.0
    %336 = vmatpush.xpose.msra.mxu0 0.0
    %337 = vmatpush.xpose.msra.mxu0 0.0
    %338 = vmatpush.xpose.msra.mxu0 0.0
    %339 = vmatpush.xpose.msra.mxu0 0.0
    %340 = vmatpush.xpose.msra.mxu0 0.0
    %341 = vmatpush.xpose.msra.mxu0 0.0
    %342 = vmatpush.xpose.msra.mxu0 %v325
    %343 = vmatmul.f32.gmra.mxu0 %v323
    %v344 = vpop.f32.mrf.mxu0
    %v345 = vadd.f32 0.0, %v344
    %346 = vdwg.mxu0
    %347 = vrot.lane.b32.xlu0 %v178, 120
    %v348 = vpop.permute.xlu0 %347
    %349 = vrot.lane.b32.xlu0 %v178, 88
    %v350 = vpop.permute.xlu0 %349
    %v351 = vsel %vm183, %v348, 0
    %v353 = vsel %vm183, %v350, 0
    %355 = vmatpush.xpose.msra.mxu0 0.0
    %356 = vmatpush.xpose.msra.mxu0 0.0
    %357 = vmatpush.xpose.msra.mxu0 0.0
    %358 = vmatpush.xpose.msra.mxu0 0.0
    %359 = vmatpush.xpose.msra.mxu0 0.0
    %360 = vmatpush.xpose.msra.mxu0 0.0
    %361 = vmatpush.xpose.msra.mxu0 0.0
    %362 = vmatpush.xpose.msra.mxu0 0.0
    %363 = vmatpush.xpose.msra.mxu0 0.0
    %364 = vmatpush.xpose.msra.mxu0 0.0
    %365 = vmatpush.xpose.msra.mxu0 0.0
    %366 = vmatpush.xpose.msra.mxu0 0.0
    %367 = vmatpush.xpose.msra.mxu0 0.0
    %368 = vmatpush.xpose.msra.mxu0 0.0
    %369 = vmatpush.xpose.msra.mxu0 0.0
    %370 = vmatpush.xpose.msra.mxu0 %v353
    %371 = vmatmul.f32.gmra.mxu0 %v351
    %v372 = vpop.f32.mrf.mxu0
    %v373 = vadd.f32 0.0, %v372
    %374 = vdwg.mxu0
    %v375 = vmul.f32 %v345, 0.35355338
    %v376 = vmul.f32 %v373, 0.35355338
    %v377 = vadd.f32 %v375, %v239
    %v378 = vadd.f32 %v376, %v240
    %v379 = vsel %vm183, %v377, -inf
    %380 = vmax.xlane.f32.xlu0 %v379
    %v381 = vpop.xlane.xlu0 %380
    %v382 = vsel %vm183, %v378, -inf
    %383 = vmax.xlane.f32.xlu0 %v382
    %v384 = vpop.xlane.xlu0 %383
    %v385 = vsub.f32 %v377, %v381
    %v386 = vsub.f32 %v378, %v384
    %v387 = vmul.f32 %v385, 1.442695
    %v388 = vpow.pop %v387
    %v389 = vmul.f32 %v386, 1.442695
    %v390 = vpow.pop %v389
    %v391 = vsel %vm183, %v388, 0.0
    %392 = vadd.xlane.f32.xlu0 %v391
    %v393 = vpop.xlane.xlu0 %392
    %v394 = vsel %vm183, %v390, 0.0
    %395 = vadd.xlane.f32.xlu0 %v394
    %v396 = vpop.xlane.xlu0 %395
    %v397 = vrcp.pop %v393
    %v398 = vrcp.pop %v396
    %v399 = vmul.f32 %v388, %v397
    %v400 = vmul.f32 %v390, %v398
    %401 = vrot.lane.b32.xlu0 %v175, 56
    %v402 = vpop.permute.xlu0 %401
    %v405 = vsel %vm183, %v399, 0
    %407 = vmatpush.msra.mxu0 0.0
    %408 = vmatpush.msra.mxu0 0.0
    %409 = vmatpush.msra.mxu0 0.0
    %410 = vmatpush.msra.mxu0 0.0
    %411 = vmatpush.msra.mxu0 0.0
    %412 = vmatpush.msra.mxu0 0.0
    %413 = vmatpush.msra.mxu0 0.0
    %414 = vmatpush.msra.mxu0 0.0
    %415 = vmatpush.msra.mxu0 0.0
    %416 = vmatpush.msra.mxu0 0.0
    %417 = vmatpush.msra.mxu0 0.0
    %418 = vmatpush.msra.mxu0 0.0
    %419 = vmatpush.msra.mxu0 0.0
    %420 = vmatpush.msra.mxu0 0.0
    %421 = vmatpush.msra.mxu0 0.0
    %422 = vmatpush.msra.mxu0 %v402
    %423 = vmatmul.f32.gmra.mxu0 %v405
    %v424 = vpop.f32.mrf.mxu0
    %v425 = vadd.f32 0.0, %v424
    %426 = vdwg.mxu0
    %427 = vrot.lane.b32.xlu0 %v178, 56
    %v428 = vpop.permute.xlu0 %427
    %v431 = vsel %vm183, %v400, 0
    %433 = vmatpush.msra.mxu0 0.0
    %434 = vmatpush.msra.mxu0 0.0
    %435 = vmatpush.msra.mxu0 0.0
    %436 = vmatpush.msra.mxu0 0.0
    %437 = vmatpush.msra.mxu0 0.0
    %438 = vmatpush.msra.mxu0 0.0
    %439 = vmatpush.msra.mxu0 0.0
    %440 = vmatpush.msra.mxu0 0.0
    %441 = vmatpush.msra.mxu0 0.0
    %442 = vmatpush.msra.mxu0 0.0
    %443 = vmatpush.msra.mxu0 0.0
    %444 = vmatpush.msra.mxu0 0.0
    %445 = vmatpush.msra.mxu0 0.0
    %446 = vmatpush.msra.mxu0 0.0
    %447 = vmatpush.msra.mxu0 0.0
    %448 = vmatpush.msra.mxu0 %v428
    %449 = vmatmul.f32.gmra.mxu0 %v431
    %v450 = vpop.f32.mrf.mxu0
    %v451 = vadd.f32 0.0, %v450
    %452 = vdwg.mxu0
    %453 = vrot.lane.b32.xlu0 %v175, 112
    %v454 = vpop.permute.xlu0 %453
    %455 = vrot.lane.b32.xlu0 %v175, 80
    %v456 = vpop.permute.xlu0 %455
    %v457 = vsel %vm183, %v454, 0
    %v459 = vsel %vm183, %v456, 0
    %461 = vmatpush.xpose.msra.mxu0 0.0
    %462 = vmatpush.xpose.msra.mxu0 0.0
    %463 = vmatpush.xpose.msra.mxu0 0.0
    %464 = vmatpush.xpose.msra.mxu0 0.0
    %465 = vmatpush.xpose.msra.mxu0 0.0
    %466 = vmatpush.xpose.msra.mxu0 0.0
    %467 = vmatpush.xpose.msra.mxu0 0.0
    %468 = vmatpush.xpose.msra.mxu0 0.0
    %469 = vmatpush.xpose.msra.mxu0 0.0
    %470 = vmatpush.xpose.msra.mxu0 0.0
    %471 = vmatpush.xpose.msra.mxu0 0.0
    %472 = vmatpush.xpose.msra.mxu0 0.0
    %473 = vmatpush.xpose.msra.mxu0 0.0
    %474 = vmatpush.xpose.msra.mxu0 0.0
    %475 = vmatpush.xpose.msra.mxu0 0.0
    %476 = vmatpush.xpose.msra.mxu0 %v459
    %477 = vmatmul.f32.gmra.mxu0 %v457
    %v478 = vpop.f32.mrf.mxu0
    %v479 = vadd.f32 0.0, %v478
    %480 = vdwg.mxu0
    %481 = vrot.lane.b32.xlu0 %v178, 112
    %v482 = vpop.permute.xlu0 %481
    %483 = vrot.lane.b32.xlu0 %v178, 80
    %v484 = vpop.permute.xlu0 %483
    %v485 = vsel %vm183, %v482, 0
    %v487 = vsel %vm183, %v484, 0
    %489 = vmatpush.xpose.msra.mxu0 0.0
    %490 = vmatpush.xpose.msra.mxu0 0.0
    %491 = vmatpush.xpose.msra.mxu0 0.0
    %492 = vmatpush.xpose.msra.mxu0 0.0
    %493 = vmatpush.xpose.msra.mxu0 0.0
    %494 = vmatpush.xpose.msra.mxu0 0.0
    %495 = vmatpush.xpose.msra.mxu0 0.0
    %496 = vmatpush.xpose.msra.mxu0 0.0
    %497 = vmatpush.xpose.msra.mxu0 0.0
    %498 = vmatpush.xpose.msra.mxu0 0.0
    %499 = vmatpush.xpose.msra.mxu0 0.0
    %500 = vmatpush.xpose.msra.mxu0 0.0
    %501 = vmatpush.xpose.msra.mxu0 0.0
    %502 = vmatpush.xpose.msra.mxu0 0.0
    %503 = vmatpush.xpose.msra.mxu0 0.0
    %504 = vmatpush.xpose.msra.mxu0 %v487
    %505 = vmatmul.f32.gmra.mxu0 %v485
    %v506 = vpop.f32.mrf.mxu0
    %v507 = vadd.f32 0.0, %v506
    %508 = vdwg.mxu0
    %v509 = vmul.f32 %v479, 0.35355338
    %v510 = vmul.f32 %v507, 0.35355338
    %v511 = vadd.f32 %v509, %v239
    %v512 = vadd.f32 %v510, %v240
    %v513 = vsel %vm183, %v511, -inf
    %514 = vmax.xlane.f32.xlu0 %v513
    %v515 = vpop.xlane.xlu0 %514
    %v516 = vsel %vm183, %v512, -inf
    %517 = vmax.xlane.f32.xlu0 %v516
    %v518 = vpop.xlane.xlu0 %517
    %v519 = vsub.f32 %v511, %v515
    %v520 = vsub.f32 %v512, %v518
    %v521 = vmul.f32 %v519, 1.442695
    %v522 = vpow.pop %v521
    %v523 = vmul.f32 %v520, 1.442695
    %v524 = vpow.pop %v523
    %v525 = vsel %vm183, %v522, 0.0
    %526 = vadd.xlane.f32.xlu0 %v525
    %v527 = vpop.xlane.xlu0 %526
    %v528 = vsel %vm183, %v524, 0.0
    %529 = vadd.xlane.f32.xlu0 %v528
    %v530 = vpop.xlane.xlu0 %529
    %v531 = vrcp.pop %v527
    %v532 = vrcp.pop %v530
    %v533 = vmul.f32 %v522, %v531
    %v534 = vmul.f32 %v524, %v532
    %535 = vrot.lane.b32.xlu0 %v175, 48
    %v536 = vpop.permute.xlu0 %535
    %v539 = vsel %vm183, %v533, 0
    %541 = vmatpush.msra.mxu0 0.0
    %542 = vmatpush.msra.mxu0 0.0
    %543 = vmatpush.msra.mxu0 0.0
    %544 = vmatpush.msra.mxu0 0.0
    %545 = vmatpush.msra.mxu0 0.0
    %546 = vmatpush.msra.mxu0 0.0
    %547 = vmatpush.msra.mxu0 0.0
    %548 = vmatpush.msra.mxu0 0.0
    %549 = vmatpush.msra.mxu0 0.0
    %550 = vmatpush.msra.mxu0 0.0
    %551 = vmatpush.msra.mxu0 0.0
    %552 = vmatpush.msra.mxu0 0.0
    %553 = vmatpush.msra.mxu0 0.0
    %554 = vmatpush.msra.mxu0 0.0
    %555 = vmatpush.msra.mxu0 0.0
    %556 = vmatpush.msra.mxu0 %v536
    %557 = vmatmul.f32.gmra.mxu0 %v539
    %v558 = vpop.f32.mrf.mxu0
    %v559 = vadd.f32 0.0, %v558
    %560 = vdwg.mxu0
    %561 = vrot.lane.b32.xlu0 %v178, 48
    %v562 = vpop.permute.xlu0 %561
    %v565 = vsel %vm183, %v534, 0
    %567 = vmatpush.msra.mxu0 0.0
    %568 = vmatpush.msra.mxu0 0.0
    %569 = vmatpush.msra.mxu0 0.0
    %570 = vmatpush.msra.mxu0 0.0
    %571 = vmatpush.msra.mxu0 0.0
    %572 = vmatpush.msra.mxu0 0.0
    %573 = vmatpush.msra.mxu0 0.0
    %574 = vmatpush.msra.mxu0 0.0
    %575 = vmatpush.msra.mxu0 0.0
    %576 = vmatpush.msra.mxu0 0.0
    %577 = vmatpush.msra.mxu0 0.0
    %578 = vmatpush.msra.mxu0 0.0
    %579 = vmatpush.msra.mxu0 0.0
    %580 = vmatpush.msra.mxu0 0.0
    %581 = vmatpush.msra.mxu0 0.0
    %582 = vmatpush.msra.mxu0 %v562
    %583 = vmatmul.f32.gmra.mxu0 %v565
    %v584 = vpop.f32.mrf.mxu0
    %v585 = vadd.f32 0.0, %v584
    %586 = vdwg.mxu0
    %587 = vrot.lane.b32.xlu0 %v175, 104
    %v588 = vpop.permute.xlu0 %587
    %589 = vrot.lane.b32.xlu0 %v175, 72
    %v590 = vpop.permute.xlu0 %589
    %v591 = vsel %vm183, %v588, 0
    %v593 = vsel %vm183, %v590, 0
    %595 = vmatpush.xpose.msra.mxu0 0.0
    %596 = vmatpush.xpose.msra.mxu0 0.0
    %597 = vmatpush.xpose.msra.mxu0 0.0
    %598 = vmatpush.xpose.msra.mxu0 0.0
    %599 = vmatpush.xpose.msra.mxu0 0.0
    %600 = vmatpush.xpose.msra.mxu0 0.0
    %601 = vmatpush.xpose.msra.mxu0 0.0
    %602 = vmatpush.xpose.msra.mxu0 0.0
    %603 = vmatpush.xpose.msra.mxu0 0.0
    %604 = vmatpush.xpose.msra.mxu0 0.0
    %605 = vmatpush.xpose.msra.mxu0 0.0
    %606 = vmatpush.xpose.msra.mxu0 0.0
    %607 = vmatpush.xpose.msra.mxu0 0.0
    %608 = vmatpush.xpose.msra.mxu0 0.0
    %609 = vmatpush.xpose.msra.mxu0 0.0
    %610 = vmatpush.xpose.msra.mxu0 %v593
    %611 = vmatmul.f32.gmra.mxu0 %v591
    %v612 = vpop.f32.mrf.mxu0
    %v613 = vadd.f32 0.0, %v612
    %614 = vdwg.mxu0
    %615 = vrot.lane.b32.xlu0 %v178, 104
    %v616 = vpop.permute.xlu0 %615
    %617 = vrot.lane.b32.xlu0 %v178, 72
    %v618 = vpop.permute.xlu0 %617
    %v619 = vsel %vm183, %v616, 0
    %v621 = vsel %vm183, %v618, 0
    %623 = vmatpush.xpose.msra.mxu0 0.0
    %624 = vmatpush.xpose.msra.mxu0 0.0
    %625 = vmatpush.xpose.msra.mxu0 0.0
    %626 = vmatpush.xpose.msra.mxu0 0.0
    %627 = vmatpush.xpose.msra.mxu0 0.0
    %628 = vmatpush.xpose.msra.mxu0 0.0
    %629 = vmatpush.xpose.msra.mxu0 0.0
    %630 = vmatpush.xpose.msra.mxu0 0.0
    %631 = vmatpush.xpose.msra.mxu0 0.0
    %632 = vmatpush.xpose.msra.mxu0 0.0
    %633 = vmatpush.xpose.msra.mxu0 0.0
    %634 = vmatpush.xpose.msra.mxu0 0.0
    %635 = vmatpush.xpose.msra.mxu0 0.0
    %636 = vmatpush.xpose.msra.mxu0 0.0
    %637 = vmatpush.xpose.msra.mxu0 0.0
    %638 = vmatpush.xpose.msra.mxu0 %v621
    %639 = vmatmul.f32.gmra.mxu0 %v619
    %v640 = vpop.f32.mrf.mxu0
    %v641 = vadd.f32 0.0, %v640
    %642 = vdwg.mxu0
    %v643 = vmul.f32 %v613, 0.35355338
    %v644 = vmul.f32 %v641, 0.35355338
    %v645 = vadd.f32 %v643, %v239
    %v646 = vadd.f32 %v644, %v240
    %v647 = vsel %vm183, %v645, -inf
    %648 = vmax.xlane.f32.xlu0 %v647
    %v649 = vpop.xlane.xlu0 %648
    %v650 = vsel %vm183, %v646, -inf
    %651 = vmax.xlane.f32.xlu0 %v650
    %v652 = vpop.xlane.xlu0 %651
    %v653 = vsub.f32 %v645, %v649
    %v654 = vsub.f32 %v646, %v652
    %v655 = vmul.f32 %v653, 1.442695
    %v656 = vpow.pop %v655
    %v657 = vmul.f32 %v654, 1.442695
    %v658 = vpow.pop %v657
    %v659 = vsel %vm183, %v656, 0.0
    %660 = vadd.xlane.f32.xlu0 %v659
    %v661 = vpop.xlane.xlu0 %660
    %v662 = vsel %vm183, %v658, 0.0
    %663 = vadd.xlane.f32.xlu0 %v662
    %v664 = vpop.xlane.xlu0 %663
    %v665 = vrcp.pop %v661
    %v666 = vrcp.pop %v664
    %v667 = vmul.f32 %v656, %v665
    %v668 = vmul.f32 %v658, %v666
    %669 = vrot.lane.b32.xlu0 %v175, 40
    %v670 = vpop.permute.xlu0 %669
    %v673 = vsel %vm183, %v667, 0
    %675 = vmatpush.msra.mxu0 0.0
    %676 = vmatpush.msra.mxu0 0.0
    %677 = vmatpush.msra.mxu0 0.0
    %678 = vmatpush.msra.mxu0 0.0
    %679 = vmatpush.msra.mxu0 0.0
    %680 = vmatpush.msra.mxu0 0.0
    %681 = vmatpush.msra.mxu0 0.0
    %682 = vmatpush.msra.mxu0 0.0
    %683 = vmatpush.msra.mxu0 0.0
    %684 = vmatpush.msra.mxu0 0.0
    %685 = vmatpush.msra.mxu0 0.0
    %686 = vmatpush.msra.mxu0 0.0
    %687 = vmatpush.msra.mxu0 0.0
    %688 = vmatpush.msra.mxu0 0.0
    %689 = vmatpush.msra.mxu0 0.0
    %690 = vmatpush.msra.mxu0 %v670
    %691 = vmatmul.f32.gmra.mxu0 %v673
    %v692 = vpop.f32.mrf.mxu0
    %v693 = vadd.f32 0.0, %v692
    %694 = vdwg.mxu0
    %695 = vrot.lane.b32.xlu0 %v178, 40
    %v696 = vpop.permute.xlu0 %695
    %v699 = vsel %vm183, %v668, 0
    %701 = vmatpush.msra.mxu0 0.0
    %702 = vmatpush.msra.mxu0 0.0
    %703 = vmatpush.msra.mxu0 0.0
    %704 = vmatpush.msra.mxu0 0.0
    %705 = vmatpush.msra.mxu0 0.0
    %706 = vmatpush.msra.mxu0 0.0
    %707 = vmatpush.msra.mxu0 0.0
    %708 = vmatpush.msra.mxu0 0.0
    %709 = vmatpush.msra.mxu0 0.0
    %710 = vmatpush.msra.mxu0 0.0
    %711 = vmatpush.msra.mxu0 0.0
    %712 = vmatpush.msra.mxu0 0.0
    %713 = vmatpush.msra.mxu0 0.0
    %714 = vmatpush.msra.mxu0 0.0
    %715 = vmatpush.msra.mxu0 0.0
    %716 = vmatpush.msra.mxu0 %v696
    %717 = vmatmul.f32.gmra.mxu0 %v699
    %v718 = vpop.f32.mrf.mxu0
    %v719 = vadd.f32 0.0, %v718
    %720 = vdwg.mxu0
    %723 = vrot.lane.b32.xlu0 %v425, 8
    %v724 = vpop.permute.xlu0 %723
    %725 = vrot.lane.b32.xlu0 %v451, 8
    %v726 = vpop.permute.xlu0 %725
    %731 = vrot.lane.b32.xlu0 %v559, 16
    %v732 = vpop.permute.xlu0 %731
    %733 = vrot.lane.b32.xlu0 %v585, 16
    %v734 = vpop.permute.xlu0 %733
    %739 = vrot.lane.b32.xlu0 %v693, 24
    %v740 = vpop.permute.xlu0 %739
    %741 = vrot.lane.b32.xlu0 %v719, 24
    %v742 = vpop.permute.xlu0 %741
    %v745 = vsel %vm183, %v291, %v724
    %v746 = vsel %vm183, %v317, %v726
    %vm747 = vcmask 130048
    %v748 = vsel %vm747, %v745, %v732
    %v749 = vsel %vm747, %v746, %v734
    %vm750 = vcmask 195584
    %v751 = vsel %vm750, %v748, %v740
    %v752 = vsel %vm750, %v749, %v742
    %v753 = vperm.slane %v143, 0
    %v755 = vsel %vm66, %v751, 0
    %v758 = vsel %vm66, %v752, 0
    %760 = vmatpush.msra.mxu0 0.0
    %761 = vmatpush.msra.mxu0 0.0
    %762 = vmatpush.msra.mxu0 0.0
    %763 = vmatpush.msra.mxu0 0.0
    %764 = vmatpush.msra.mxu0 0.0
    %765 = vmatpush.msra.mxu0 0.0
    %766 = vmatpush.msra.mxu0 0.0
    %767 = vmatpush.msra.mxu0 0.0
    %768 = vmatpush.msra.mxu0 0.0
    %769 = vmatpush.msra.mxu0 0.0
    %770 = vmatpush.msra.mxu0 0.0
    %771 = vmatpush.msra.mxu0 0.0
    %772 = vmatpush.msra.mxu0 %v133
    %773 = vmatpush.msra.mxu0 %v132
    %774 = vmatpush.msra.mxu0 %v131
    %775 = vmatpush.msra.mxu0 %v130
    %776 = vmatmul.f32.gmra.mxu0 %v755
    %v777 = vpop.f32.mrf.mxu0
    %v778 = vadd.f32 %v753, %v777
    %779 = vmatmul.f32.gmra.mxu0 %v758
    %v780 = vpop.f32.mrf.mxu0
    %v781 = vadd.f32 %v753, %v780
    %782 = vdwg.mxu0
    %v783 = vadd.f32 %v122, %v778
    %v784 = vadd.f32 %v123, %v781
    %v785 = vsel %vm66, %v783, 0.0
    %786 = vadd.xlane.f32.xlu0 %v785
    %v787 = vpop.xlane.xlu0 %786
    %v788 = vsel %vm66, %v784, 0.0
    %789 = vadd.xlane.f32.xlu0 %v788
    %v790 = vpop.xlane.xlu0 %789
    %v791 = vmul.f32 %v787, %v79
    %v792 = vmul.f32 %v790, %v79
    %v793 = vsub.f32 %v783, %v791
    %v794 = vsub.f32 %v784, %v792
    %v795 = vmul.f32 %v793, %v793
    %v796 = vmul.f32 %v794, %v794
    %v797 = vsel %vm66, %v795, 0.0
    %798 = vadd.xlane.f32.xlu0 %v797
    %v799 = vpop.xlane.xlu0 %798
    %v800 = vsel %vm66, %v796, 0.0
    %801 = vadd.xlane.f32.xlu0 %v800
    %v802 = vpop.xlane.xlu0 %801
    %v803 = vmul.f32 %v799, %v79
    %v804 = vmul.f32 %v802, %v79
    %v805 = vadd.f32 %v803, 1e-12
    %v806 = vadd.f32 %v804, 1e-12
    %v807 = vrsqrt.pop %v805
    %v808 = vmul.f32 %v807, %v805
    %v809 = vmul.f32 %v808, %v807
    %v810 = vmul.f32 0.5, %v809
    %v811 = vsub.f32 1.5, %v810
    %v812 = vmul.f32 %v807, %v811
    %vm813 = vweird.f32 %v805
    %vm814 = vweird.f32 %v807
    %vm815 = vmor %vm813, %vm814
    %v816 = vsel %vm815, %v807, %v812
    %v817 = vrsqrt.pop %v806
    %v818 = vmul.f32 %v817, %v806
    %v819 = vmul.f32 %v818, %v817
    %v820 = vmul.f32 0.5, %v819
    %v821 = vsub.f32 1.5, %v820
    %v822 = vmul.f32 %v817, %v821
    %vm823 = vweird.f32 %v806
    %vm824 = vweird.f32 %v817
    %vm825 = vmor %vm823, %vm824
    %v826 = vsel %vm825, %v817, %v822
    %v827 = vmul.f32 %v793, %v816
    %v828 = vmul.f32 %v794, %v826
    %v829 = vperm.slane %v146, 0
    %v830 = vmul.f32 %v827, %v829
    %v831 = vmul.f32 %v828, %v829
    %v832 = vperm.slane %v147, 0
    %v833 = vadd.f32 %v830, %v832
    %v834 = vadd.f32 %v831, %v832
    %v835 = vperm.slane %v144, 0
    %v837 = vsel %vm66, %v833, 0
    %v840 = vsel %vm66, %v834, 0
    %842 = vmatpush.msra.mxu0 0.0
    %843 = vmatpush.msra.mxu0 0.0
    %844 = vmatpush.msra.mxu0 0.0
    %845 = vmatpush.msra.mxu0 0.0
    %846 = vmatpush.msra.mxu0 0.0
    %847 = vmatpush.msra.mxu0 0.0
    %848 = vmatpush.msra.mxu0 0.0
    %849 = vmatpush.msra.mxu0 0.0
    %850 = vmatpush.msra.mxu0 0.0
    %851 = vmatpush.msra.mxu0 0.0
    %852 = vmatpush.msra.mxu0 0.0
    %853 = vmatpush.msra.mxu0 0.0
    %854 = vmatpush.msra.mxu0 %v137
    %855 = vmatpush.msra.mxu0 %v136
    %856 = vmatpush.msra.mxu0 %v135
    %857 = vmatpush.msra.mxu0 %v134
    %858 = vmatmul.f32.gmra.mxu0 %v837
    %v859 = vpop.f32.mrf.mxu0
    %v860 = vadd.f32 %v835, %v859
    %861 = vmatmul.f32.gmra.mxu0 %v840
    %v862 = vpop.f32.mrf.mxu0
    %v863 = vadd.f32 %v835, %v862
    %864 = vdwg.mxu0
    %v865 = vmul.f32 %v860, 0.5
    %v866 = vmul.f32 %v863, 0.5
    %v867 = vmul.f32 %v860, 0.70710677
    %v868 = vmul.f32 %v863, 0.70710677
    %v869 = vmul.f32 %v867, %v867
    %v870 = vmin.f32 16.0, %v869
    %v871 = vmul.f32 %v870, 2.1237322e-06
    %v872 = vadd.f32 %v871, 0.00028619796
    %v873 = vmul.f32 %v870, %v872
    %v874 = vadd.f32 %v873, 0.0036580483
    %v875 = vmul.f32 %v870, %v874
    %v876 = vadd.f32 %v875, 0.05243302
    %v877 = vmul.f32 %v870, %v876
    %v878 = vadd.f32 %v877, 0.18741608
    %v879 = vmul.f32 %v870, %v878
    %v880 = vadd.f32 %v879, 1.1283791
    %v881 = vmul.f32 %v867, %v880
    %v882 = vmul.f32 %v870, 3.8918573e-05
    %v883 = vadd.f32 %v882, 0.001143296
    %v884 = vmul.f32 %v870, %v883
    %v885 = vadd.f32 %v884, 0.014752088
    %v886 = vmul.f32 %v870, %v885
    %v887 = vadd.f32 %v886, 0.112945676
    %v888 = vmul.f32 %v870, %v887
    %v889 = vadd.f32 %v888, 0.4994258
    %v890 = vmul.f32 %v870, %v889
    %v891 = vadd.f32 %v890, 1.0
    %v892 = vrcp.pop %v891
    %v893 = vmul.f32 %v891, %v892
    %v894 = vsub.f32 1.0, %v893
    %v895 = vmul.f32 %v892, %v894
    %v896 = vadd.f32 %v892, %v895
    %vm897 = vweird.f32 %v891
    %vm898 = vweird.f32 %v892
    %vm899 = vmor %vm897, %vm898
    %v900 = vsel %vm899, %v892, %v896
    %v901 = vand.u32 2147483647, %v891
    %vm902 = vcmp.eq.f32.partialorder %v901, 8.507059e+37
    %v903 = vand.u32 %v891, 2147483648
    %v904 = vor.u32 1.1754944e-38, %v903
    %v905 = vsel %vm902, %v904, %v900
    %v906 = vmul.f32 %v881, %v905
    %v907 = vmin.f32 %v906, 1.0
    %v908 = vmax.f32 %v907, -1.0
    %v909 = vmul.f32 %v868, %v868
    %v910 = vmin.f32 16.0, %v909
    %v911 = vmul.f32 %v910, 2.1237322e-06
    %v912 = vadd.f32 %v911, 0.00028619796
    %v913 = vmul.f32 %v910, %v912
    %v914 = vadd.f32 %v913, 0.0036580483
    %v915 = vmul.f32 %v910, %v914
    %v916 = vadd.f32 %v915, 0.05243302
    %v917 = vmul.f32 %v910, %v916
    %v918 = vadd.f32 %v917, 0.18741608
    %v919 = vmul.f32 %v910, %v918
    %v920 = vadd.f32 %v919, 1.1283791
    %v921 = vmul.f32 %v868, %v920
    %v922 = vmul.f32 %v910, 3.8918573e-05
    %v923 = vadd.f32 %v922, 0.001143296
    %v924 = vmul.f32 %v910, %v923
    %v925 = vadd.f32 %v924, 0.014752088
    %v926 = vmul.f32 %v910, %v925
    %v927 = vadd.f32 %v926, 0.112945676
    %v928 = vmul.f32 %v910, %v927
    %v929 = vadd.f32 %v928, 0.4994258
    %v930 = vmul.f32 %v910, %v929
    %v931 = vadd.f32 %v930, 1.0
    %v932 = vrcp.pop %v931
    %v933 = vmul.f32 %v931, %v932
    %v934 = vsub.f32 1.0, %v933
    %v935 = vmul.f32 %v932, %v934
    %v936 = vadd.f32 %v932, %v935
    %vm937 = vweird.f32 %v931
    %vm938 = vweird.f32 %v932
    %vm939 = vmor %vm937, %vm938
    %v940 = vsel %vm939, %v932, %v936
    %v941 = vand.u32 2147483647, %v931
    %vm942 = vcmp.eq.f32.partialorder %v941, 8.507059e+37
    %v943 = vand.u32 %v931, 2147483648
    %v944 = vor.u32 1.1754944e-38, %v943
    %v945 = vsel %vm942, %v944, %v940
    %v946 = vmul.f32 %v921, %v945
    %v947 = vmin.f32 %v946, 1.0
    %v948 = vmax.f32 %v947, -1.0
    %v949 = vadd.f32 %v908, 1.0
    %v950 = vadd.f32 %v948, 1.0
    %v951 = vmul.f32 %v865, %v949
    %v952 = vmul.f32 %v866, %v950
    %v953 = vperm.slane %v145, 0
    %954 = vmatpush.xpose.msra.mxu0 0.0
    %955 = vmatpush.xpose.msra.mxu0 0.0
    %956 = vmatpush.xpose.msra.mxu0 0.0
    %957 = vmatpush.xpose.msra.mxu0 0.0
    %958 = vmatpush.xpose.msra.mxu0 0.0
    %959 = vmatpush.xpose.msra.mxu0 0.0
    %960 = vmatpush.xpose.msra.mxu0 0.0
    %961 = vmatpush.xpose.msra.mxu0 0.0
    %962 = vmatpush.xpose.msra.mxu0 0.0
    %963 = vmatpush.xpose.msra.mxu0 0.0
    %964 = vmatpush.xpose.msra.mxu0 0.0
    %965 = vmatpush.xpose.msra.mxu0 0.0
    %966 = vmatpush.xpose.msra.mxu0 %v141
    %967 = vmatpush.xpose.msra.mxu0 %v140
    %968 = vmatpush.xpose.msra.mxu0 %v139
    %969 = vmatpush.xpose.msra.mxu0 %v138
    %970 = vmatmul.f32.gmra.mxu0 %v951
    %v971 = vpop.f32.mrf.mxu0
    %v972 = vadd.f32 %v953, %v971
    %973 = vmatmul.f32.gmra.mxu0 %v952
    %v974 = vpop.f32.mrf.mxu0
    %v975 = vadd.f32 %v953, %v974
    %976 = vdwg.mxu0
    %v977 = vadd.f32 %v833, %v972
    %v978 = vadd.f32 %v834, %v975
    %v979 = vsel %vm66, %v977, 0.0
    %980 = vadd.xlane.f32.xlu0 %v979
    %v981 = vpop.xlane.xlu0 %980
    %v982 = vsel %vm66, %v978, 0.0
    %983 = vadd.xlane.f32.xlu0 %v982
    %v984 = vpop.xlane.xlu0 %983
    %v985 = vmul.f32 %v981, %v79
    %v986 = vmul.f32 %v984, %v79
    %v987 = vsub.f32 %v977, %v985
    %v988 = vsub.f32 %v978, %v986
    %v989 = vmul.f32 %v987, %v987
    %v990 = vmul.f32 %v988, %v988
    %v991 = vsel %vm66, %v989, 0.0
    %992 = vadd.xlane.f32.xlu0 %v991
    %v993 = vpop.xlane.xlu0 %992
    %v994 = vsel %vm66, %v990, 0.0
    %995 = vadd.xlane.f32.xlu0 %v994
    %v996 = vpop.xlane.xlu0 %995
    %v997 = vmul.f32 %v993, %v79
    %v998 = vmul.f32 %v996, %v79
    %v999 = vadd.f32 %v997, 1e-12
    %v1000 = vadd.f32 %v998, 1e-12
    %v1001 = vrsqrt.pop %v999
    %v1002 = vmul.f32 %v1001, %v999
    %v1003 = vmul.f32 %v1002, %v1001
    %v1004 = vmul.f32 0.5, %v1003
    %v1005 = vsub.f32 1.5, %v1004
    %v1006 = vmul.f32 %v1001, %v1005
    %vm1007 = vweird.f32 %v999
    %vm1008 = vweird.f32 %v1001
    %vm1009 = vmor %vm1007, %vm1008
    %v1010 = vsel %vm1009, %v1001, %v1006
    %v1011 = vrsqrt.pop %v1000
    %v1012 = vmul.f32 %v1011, %v1000
    %v1013 = vmul.f32 %v1012, %v1011
    %v1014 = vmul.f32 0.5, %v1013
    %v1015 = vsub.f32 1.5, %v1014
    %v1016 = vmul.f32 %v1011, %v1015
    %vm1017 = vweird.f32 %v1000
    %vm1018 = vweird.f32 %v1011
    %vm1019 = vmor %vm1017, %vm1018
    %v1020 = vsel %vm1019, %v1011, %v1016
    %v1021 = vmul.f32 %v987, %v1010
    %v1022 = vmul.f32 %v988, %v1020
    %v1023 = vperm.slane %v148, 0
    %v1024 = vmul.f32 %v1021, %v1023
    %v1025 = vmul.f32 %v1022, %v1023
    %v1026 = vperm.slane %v149, 0
    %v1027 = vadd.f32 %v1024, %v1026
    %v1028 = vadd.f32 %v1025, %v1026
    %v1029 = vld [vmem:[#allocation7 + $0x90] sm:$0xff]
    %v1030 = vld [vmem:[#allocation7 + $0x98] sm:$0xff]
    %v1031 = vld [vmem:[#allocation7 + $0xa0] sm:$0xff]
    %v1032 = vld [vmem:[#allocation7 + $0xa8] sm:$0xff]
    %v1033 = vld [vmem:[#allocation7 + $0xb0] sm:$0xff]
    %v1034 = vld [vmem:[#allocation7 + $0xb8] sm:$0xff]
    %v1035 = vld [vmem:[#allocation7 + $0xc0] sm:$0xff]
    %v1036 = vld [vmem:[#allocation7 + $0xc8] sm:$0xff]
    %v1037 = vld [vmem:[#allocation7 + $0xd0] sm:$0xff]
    %v1038 = vld [vmem:[#allocation7 + $0xd8] sm:$0xff]
    %v1039 = vld [vmem:[#allocation7 + $0xe0] sm:$0xff]
    %v1040 = vld [vmem:[#allocation7 + $0xe8] sm:$0xff]
    %v1041 = vld [vmem:[#allocation7 + $0xf0] sm:$0xff]
    %v1042 = vld [vmem:[#allocation7 + $0xf8] sm:$0xff]
    %v1043 = vld [vmem:[#allocation7 + $0x100] sm:$0xff]
    %v1044 = vld [vmem:[#allocation7 + $0x108] sm:$0xff]
    %v1045 = vld [vmem:[#allocation7 + $0x110] sm:$0x1]
    %v1046 = vld [vmem:[#allocation7 + $0x111] sm:$0x1]
    %v1047 = vld [vmem:[#allocation7 + $0x112] sm:$0x1]
    %v1048 = vld [vmem:[#allocation7 + $0x113] sm:$0x1]
    %v1049 = vld [vmem:[#allocation7 + $0x114] sm:$0x1]
    %v1050 = vld [vmem:[#allocation7 + $0x115] sm:$0x1]
    %v1051 = vld [vmem:[#allocation7 + $0x116] sm:$0x1]
    %v1052 = vld [vmem:[#allocation7 + $0x117] sm:$0x1]
    %v1053 = vperm.slane %v1045, 0
    %v1055 = vsel %vm66, %v1027, 0
    %v1058 = vsel %vm66, %v1028, 0
    %1060 = vmatpush.msra.mxu0 0.0
    %1061 = vmatpush.msra.mxu0 0.0
    %1062 = vmatpush.msra.mxu0 0.0
    %1063 = vmatpush.msra.mxu0 0.0
    %1064 = vmatpush.msra.mxu0 0.0
    %1065 = vmatpush.msra.mxu0 0.0
    %1066 = vmatpush.msra.mxu0 0.0
    %1067 = vmatpush.msra.mxu0 0.0
    %1068 = vmatpush.msra.mxu0 0.0
    %1069 = vmatpush.msra.mxu0 0.0
    %1070 = vmatpush.msra.mxu0 0.0
    %1071 = vmatpush.msra.mxu0 0.0
    %1072 = vmatpush.msra.mxu0 %v1032
    %1073 = vmatpush.msra.mxu0 %v1031
    %1074 = vmatpush.msra.mxu0 %v1030
    %1075 = vmatpush.msra.mxu0 %v1029
    %1076 = vmatmul.f32.gmra.mxu0 %v1055
    %v1077 = vpop.f32.mrf.mxu0
    %v1078 = vadd.f32 %v1053, %v1077
    %1079 = vmatmul.f32.gmra.mxu0 %v1058
    %v1080 = vpop.f32.mrf.mxu0
    %v1081 = vadd.f32 %v1053, %v1080
    %1082 = vdwg.mxu0
    %1084 = vrot.lane.b32.xlu0 %v1078, 96
    %v1085 = vpop.permute.xlu0 %1084
    %v1086 = vsel %vm183, %v1078, 0
    %v1088 = vsel %vm183, %v1085, 0
    %1090 = vmatpush.xpose.msra.mxu0 0.0
    %1091 = vmatpush.xpose.msra.mxu0 0.0
    %1092 = vmatpush.xpose.msra.mxu0 0.0
    %1093 = vmatpush.xpose.msra.mxu0 0.0
    %1094 = vmatpush.xpose.msra.mxu0 0.0
    %1095 = vmatpush.xpose.msra.mxu0 0.0
    %1096 = vmatpush.xpose.msra.mxu0 0.0
    %1097 = vmatpush.xpose.msra.mxu0 0.0
    %1098 = vmatpush.xpose.msra.mxu0 0.0
    %1099 = vmatpush.xpose.msra.mxu0 0.0
    %1100 = vmatpush.xpose.msra.mxu0 0.0
    %1101 = vmatpush.xpose.msra.mxu0 0.0
    %1102 = vmatpush.xpose.msra.mxu0 0.0
    %1103 = vmatpush.xpose.msra.mxu0 0.0
    %1104 = vmatpush.xpose.msra.mxu0 0.0
    %1105 = vmatpush.xpose.msra.mxu0 %v1088
    %1106 = vmatmul.f32.gmra.mxu0 %v1086
    %v1107 = vpop.f32.mrf.mxu0
    %v1108 = vadd.f32 0.0, %v1107
    %1109 = vdwg.mxu0
    %1111 = vrot.lane.b32.xlu0 %v1081, 96
    %v1112 = vpop.permute.xlu0 %1111
    %v1113 = vsel %vm183, %v1081, 0
    %v1115 = vsel %vm183, %v1112, 0
    %1117 = vmatpush.xpose.msra.mxu0 0.0
    %1118 = vmatpush.xpose.msra.mxu0 0.0
    %1119 = vmatpush.xpose.msra.mxu0 0.0
    %1120 = vmatpush.xpose.msra.mxu0 0.0
    %1121 = vmatpush.xpose.msra.mxu0 0.0
    %1122 = vmatpush.xpose.msra.mxu0 0.0
    %1123 = vmatpush.xpose.msra.mxu0 0.0
    %1124 = vmatpush.xpose.msra.mxu0 0.0
    %1125 = vmatpush.xpose.msra.mxu0 0.0
    %1126 = vmatpush.xpose.msra.mxu0 0.0
    %1127 = vmatpush.xpose.msra.mxu0 0.0
    %1128 = vmatpush.xpose.msra.mxu0 0.0
    %1129 = vmatpush.xpose.msra.mxu0 0.0
    %1130 = vmatpush.xpose.msra.mxu0 0.0
    %1131 = vmatpush.xpose.msra.mxu0 0.0
    %1132 = vmatpush.xpose.msra.mxu0 %v1115
    %1133 = vmatmul.f32.gmra.mxu0 %v1113
    %v1134 = vpop.f32.mrf.mxu0
    %v1135 = vadd.f32 0.0, %v1134
    %1136 = vdwg.mxu0
    %v1137 = vmul.f32 %v1108, 0.35355338
    %v1138 = vmul.f32 %v1135, 0.35355338
    %v1139 = vadd.f32 %v1137, %v239
    %v1140 = vadd.f32 %v1138, %v240
    %v1141 = vsel %vm183, %v1139, -inf
    %1142 = vmax.xlane.f32.xlu0 %v1141
    %v1143 = vpop.xlane.xlu0 %1142
    %v1144 = vsel %vm183, %v1140, -inf
    %1145 = vmax.xlane.f32.xlu0 %v1144
    %v1146 = vpop.xlane.xlu0 %1145
    %v1147 = vsub.f32 %v1139, %v1143
    %v1148 = vsub.f32 %v1140, %v1146
    %v1149 = vmul.f32 %v1147, 1.442695
    %v1150 = vpow.pop %v1149
    %v1151 = vmul.f32 %v1148, 1.442695
    %v1152 = vpow.pop %v1151
    %v1153 = vsel %vm183, %v1150, 0.0
    %1154 = vadd.xlane.f32.xlu0 %v1153
    %v1155 = vpop.xlane.xlu0 %1154
    %v1156 = vsel %vm183, %v1152, 0.0
    %1157 = vadd.xlane.f32.xlu0 %v1156
    %v1158 = vpop.xlane.xlu0 %1157
    %v1159 = vrcp.pop %v1155
    %v1160 = vrcp.pop %v1158
    %v1161 = vmul.f32 %v1150, %v1159
    %v1162 = vmul.f32 %v1152, %v1160
    %1163 = vrot.lane.b32.xlu0 %v1078, 64
    %v1164 = vpop.permute.xlu0 %1163
    %v1167 = vsel %vm183, %v1161, 0
    %1169 = vmatpush.msra.mxu0 0.0
    %1170 = vmatpush.msra.mxu0 0.0
    %1171 = vmatpush.msra.mxu0 0.0
    %1172 = vmatpush.msra.mxu0 0.0
    %1173 = vmatpush.msra.mxu0 0.0
    %1174 = vmatpush.msra.mxu0 0.0
    %1175 = vmatpush.msra.mxu0 0.0
    %1176 = vmatpush.msra.mxu0 0.0
    %1177 = vmatpush.msra.mxu0 0.0
    %1178 = vmatpush.msra.mxu0 0.0
    %1179 = vmatpush.msra.mxu0 0.0
    %1180 = vmatpush.msra.mxu0 0.0
    %1181 = vmatpush.msra.mxu0 0.0
    %1182 = vmatpush.msra.mxu0 0.0
    %1183 = vmatpush.msra.mxu0 0.0
    %1184 = vmatpush.msra.mxu0 %v1164
    %1185 = vmatmul.f32.gmra.mxu0 %v1167
    %v1186 = vpop.f32.mrf.mxu0
    %v1187 = vadd.f32 0.0, %v1186
    %1188 = vdwg.mxu0
    %1189 = vrot.lane.b32.xlu0 %v1081, 64
    %v1190 = vpop.permute.xlu0 %1189
    %v1193 = vsel %vm183, %v1162, 0
    %1195 = vmatpush.msra.mxu0 0.0
    %1196 = vmatpush.msra.mxu0 0.0
    %1197 = vmatpush.msra.mxu0 0.0
    %1198 = vmatpush.msra.mxu0 0.0
    %1199 = vmatpush.msra.mxu0 0.0
    %1200 = vmatpush.msra.mxu0 0.0
    %1201 = vmatpush.msra.mxu0 0.0
    %1202 = vmatpush.msra.mxu0 0.0
    %1203 = vmatpush.msra.mxu0 0.0
    %1204 = vmatpush.msra.mxu0 0.0
    %1205 = vmatpush.msra.mxu0 0.0
    %1206 = vmatpush.msra.mxu0 0.0
    %1207 = vmatpush.msra.mxu0 0.0
    %1208 = vmatpush.msra.mxu0 0.0
    %1209 = vmatpush.msra.mxu0 0.0
    %1210 = vmatpush.msra.mxu0 %v1190
    %1211 = vmatmul.f32.gmra.mxu0 %v1193
    %v1212 = vpop.f32.mrf.mxu0
    %v1213 = vadd.f32 0.0, %v1212
    %1214 = vdwg.mxu0
    %1215 = vrot.lane.b32.xlu0 %v1078, 120
    %v1216 = vpop.permute.xlu0 %1215
    %1217 = vrot.lane.b32.xlu0 %v1078, 88
    %v1218 = vpop.permute.xlu0 %1217
    %v1219 = vsel %vm183, %v1216, 0
    %v1221 = vsel %vm183, %v1218, 0
    %1223 = vmatpush.xpose.msra.mxu0 0.0
    %1224 = vmatpush.xpose.msra.mxu0 0.0
    %1225 = vmatpush.xpose.msra.mxu0 0.0
    %1226 = vmatpush.xpose.msra.mxu0 0.0
    %1227 = vmatpush.xpose.msra.mxu0 0.0
    %1228 = vmatpush.xpose.msra.mxu0 0.0
    %1229 = vmatpush.xpose.msra.mxu0 0.0
    %1230 = vmatpush.xpose.msra.mxu0 0.0
    %1231 = vmatpush.xpose.msra.mxu0 0.0
    %1232 = vmatpush.xpose.msra.mxu0 0.0
    %1233 = vmatpush.xpose.msra.mxu0 0.0
    %1234 = vmatpush.xpose.msra.mxu0 0.0
    %1235 = vmatpush.xpose.msra.mxu0 0.0
    %1236 = vmatpush.xpose.msra.mxu0 0.0
    %1237 = vmatpush.xpose.msra.mxu0 0.0
    %1238 = vmatpush.xpose.msra.mxu0 %v1221
    %1239 = vmatmul.f32.gmra.mxu0 %v1219
    %v1240 = vpop.f32.mrf.mxu0
    %v1241 = vadd.f32 0.0, %v1240
    %1242 = vdwg.mxu0
    %1243 = vrot.lane.b32.xlu0 %v1081, 120
    %v1244 = vpop.permute.xlu0 %1243
    %1245 = vrot.lane.b32.xlu0 %v1081, 88
    %v1246 = vpop.permute.xlu0 %1245
    %v1247 = vsel %vm183, %v1244, 0
    %v1249 = vsel %vm183, %v1246, 0
    %1251 = vmatpush.xpose.msra.mxu0 0.0
    %1252 = vmatpush.xpose.msra.mxu0 0.0
    %1253 = vmatpush.xpose.msra.mxu0 0.0
    %1254 = vmatpush.xpose.msra.mxu0 0.0
    %1255 = vmatpush.xpose.msra.mxu0 0.0
    %1256 = vmatpush.xpose.msra.mxu0 0.0
    %1257 = vmatpush.xpose.msra.mxu0 0.0
    %1258 = vmatpush.xpose.msra.mxu0 0.0
    %1259 = vmatpush.xpose.msra.mxu0 0.0
    %1260 = vmatpush.xpose.msra.mxu0 0.0
    %1261 = vmatpush.xpose.msra.mxu0 0.0
    %1262 = vmatpush.xpose.msra.mxu0 0.0
    %1263 = vmatpush.xpose.msra.mxu0 0.0
    %1264 = vmatpush.xpose.msra.mxu0 0.0
    %1265 = vmatpush.xpose.msra.mxu0 0.0
    %1266 = vmatpush.xpose.msra.mxu0 %v1249
    %1267 = vmatmul.f32.gmra.mxu0 %v1247
    %v1268 = vpop.f32.mrf.mxu0
    %v1269 = vadd.f32 0.0, %v1268
    %1270 = vdwg.mxu0
    %v1271 = vmul.f32 %v1241, 0.35355338
    %v1272 = vmul.f32 %v1269, 0.35355338
    %v1273 = vadd.f32 %v1271, %v239
    %v1274 = vadd.f32 %v1272, %v240
    %v1275 = vsel %vm183, %v1273, -inf
    %1276 = vmax.xlane.f32.xlu0 %v1275
    %v1277 = vpop.xlane.xlu0 %1276
    %v1278 = vsel %vm183, %v1274, -inf
    %1279 = vmax.xlane.f32.xlu0 %v1278
    %v1280 = vpop.xlane.xlu0 %1279
    %v1281 = vsub.f32 %v1273, %v1277
    %v1282 = vsub.f32 %v1274, %v1280
    %v1283 = vmul.f32 %v1281, 1.442695
    %v1284 = vpow.pop %v1283
    %v1285 = vmul.f32 %v1282, 1.442695
    %v1286 = vpow.pop %v1285
    %v1287 = vsel %vm183, %v1284, 0.0
    %1288 = vadd.xlane.f32.xlu0 %v1287
    %v1289 = vpop.xlane.xlu0 %1288
    %v1290 = vsel %vm183, %v1286, 0.0
    %1291 = vadd.xlane.f32.xlu0 %v1290
    %v1292 = vpop.xlane.xlu0 %1291
    %v1293 = vrcp.pop %v1289
    %v1294 = vrcp.pop %v1292
    %v1295 = vmul.f32 %v1284, %v1293
    %v1296 = vmul.f32 %v1286, %v1294
    %1297 = vrot.lane.b32.xlu0 %v1078, 56
    %v1298 = vpop.permute.xlu0 %1297
    %v1301 = vsel %vm183, %v1295, 0
    %1303 = vmatpush.msra.mxu0 0.0
    %1304 = vmatpush.msra.mxu0 0.0
    %1305 = vmatpush.msra.mxu0 0.0
    %1306 = vmatpush.msra.mxu0 0.0
    %1307 = vmatpush.msra.mxu0 0.0
    %1308 = vmatpush.msra.mxu0 0.0
    %1309 = vmatpush.msra.mxu0 0.0
    %1310 = vmatpush.msra.mxu0 0.0
    %1311 = vmatpush.msra.mxu0 0.0
    %1312 = vmatpush.msra.mxu0 0.0
    %1313 = vmatpush.msra.mxu0 0.0
    %1314 = vmatpush.msra.mxu0 0.0
    %1315 = vmatpush.msra.mxu0 0.0
    %1316 = vmatpush.msra.mxu0 0.0
    %1317 = vmatpush.msra.mxu0 0.0
    %1318 = vmatpush.msra.mxu0 %v1298
    %1319 = vmatmul.f32.gmra.mxu0 %v1301
    %v1320 = vpop.f32.mrf.mxu0
    %v1321 = vadd.f32 0.0, %v1320
    %1322 = vdwg.mxu0
    %1323 = vrot.lane.b32.xlu0 %v1081, 56
    %v1324 = vpop.permute.xlu0 %1323
    %v1327 = vsel %vm183, %v1296, 0
    %1329 = vmatpush.msra.mxu0 0.0
    %1330 = vmatpush.msra.mxu0 0.0
    %1331 = vmatpush.msra.mxu0 0.0
    %1332 = vmatpush.msra.mxu0 0.0
    %1333 = vmatpush.msra.mxu0 0.0
    %1334 = vmatpush.msra.mxu0 0.0
    %1335 = vmatpush.msra.mxu0 0.0
    %1336 = vmatpush.msra.mxu0 0.0
    %1337 = vmatpush.msra.mxu0 0.0
    %1338 = vmatpush.msra.mxu0 0.0
    %1339 = vmatpush.msra.mxu0 0.0
    %1340 = vmatpush.msra.mxu0 0.0
    %1341 = vmatpush.msra.mxu0 0.0
    %1342 = vmatpush.msra.mxu0 0.0
    %1343 = vmatpush.msra.mxu0 0.0
    %1344 = vmatpush.msra.mxu0 %v1324
    %1345 = vmatmul.f32.gmra.mxu0 %v1327
    %v1346 = vpop.f32.mrf.mxu0
    %v1347 = vadd.f32 0.0, %v1346
    %1348 = vdwg.mxu0
    %1349 = vrot.lane.b32.xlu0 %v1078, 112
    %v1350 = vpop.permute.xlu0 %1349
    %1351 = vrot.lane.b32.xlu0 %v1078, 80
    %v1352 = vpop.permute.xlu0 %1351
    %v1353 = vsel %vm183, %v1350, 0
    %v1355 = vsel %vm183, %v1352, 0
    %1357 = vmatpush.xpose.msra.mxu0 0.0
    %1358 = vmatpush.xpose.msra.mxu0 0.0
    %1359 = vmatpush.xpose.msra.mxu0 0.0
    %1360 = vmatpush.xpose.msra.mxu0 0.0
    %1361 = vmatpush.xpose.msra.mxu0 0.0
    %1362 = vmatpush.xpose.msra.mxu0 0.0
    %1363 = vmatpush.xpose.msra.mxu0 0.0
    %1364 = vmatpush.xpose.msra.mxu0 0.0
    %1365 = vmatpush.xpose.msra.mxu0 0.0
    %1366 = vmatpush.xpose.msra.mxu0 0.0
    %1367 = vmatpush.xpose.msra.mxu0 0.0
    %1368 = vmatpush.xpose.msra.mxu0 0.0
    %1369 = vmatpush.xpose.msra.mxu0 0.0
    %1370 = vmatpush.xpose.msra.mxu0 0.0
    %1371 = vmatpush.xpose.msra.mxu0 0.0
    %1372 = vmatpush.xpose.msra.mxu0 %v1355
    %1373 = vmatmul.f32.gmra.mxu0 %v1353
    %v1374 = vpop.f32.mrf.mxu0
    %v1375 = vadd.f32 0.0, %v1374
    %1376 = vdwg.mxu0
    %1377 = vrot.lane.b32.xlu0 %v1081, 112
    %v1378 = vpop.permute.xlu0 %1377
    %1379 = vrot.lane.b32.xlu0 %v1081, 80
    %v1380 = vpop.permute.xlu0 %1379
    %v1381 = vsel %vm183, %v1378, 0
    %v1383 = vsel %vm183, %v1380, 0
    %1385 = vmatpush.xpose.msra.mxu0 0.0
    %1386 = vmatpush.xpose.msra.mxu0 0.0
    %1387 = vmatpush.xpose.msra.mxu0 0.0
    %1388 = vmatpush.xpose.msra.mxu0 0.0
    %1389 = vmatpush.xpose.msra.mxu0 0.0
    %1390 = vmatpush.xpose.msra.mxu0 0.0
    %1391 = vmatpush.xpose.msra.mxu0 0.0
    %1392 = vmatpush.xpose.msra.mxu0 0.0
    %1393 = vmatpush.xpose.msra.mxu0 0.0
    %1394 = vmatpush.xpose.msra.mxu0 0.0
    %1395 = vmatpush.xpose.msra.mxu0 0.0
    %1396 = vmatpush.xpose.msra.mxu0 0.0
    %1397 = vmatpush.xpose.msra.mxu0 0.0
    %1398 = vmatpush.xpose.msra.mxu0 0.0
    %1399 = vmatpush.xpose.msra.mxu0 0.0
    %1400 = vmatpush.xpose.msra.mxu0 %v1383
    %1401 = vmatmul.f32.gmra.mxu0 %v1381
    %v1402 = vpop.f32.mrf.mxu0
    %v1403 = vadd.f32 0.0, %v1402
    %1404 = vdwg.mxu0
    %v1405 = vmul.f32 %v1375, 0.35355338
    %v1406 = vmul.f32 %v1403, 0.35355338
    %v1407 = vadd.f32 %v1405, %v239
    %v1408 = vadd.f32 %v1406, %v240
    %v1409 = vsel %vm183, %v1407, -inf
    %1410 = vmax.xlane.f32.xlu0 %v1409
    %v1411 = vpop.xlane.xlu0 %1410
    %v1412 = vsel %vm183, %v1408, -inf
    %1413 = vmax.xlane.f32.xlu0 %v1412
    %v1414 = vpop.xlane.xlu0 %1413
    %v1415 = vsub.f32 %v1407, %v1411
    %v1416 = vsub.f32 %v1408, %v1414
    %v1417 = vmul.f32 %v1415, 1.442695
    %v1418 = vpow.pop %v1417
    %v1419 = vmul.f32 %v1416, 1.442695
    %v1420 = vpow.pop %v1419
    %v1421 = vsel %vm183, %v1418, 0.0
    %1422 = vadd.xlane.f32.xlu0 %v1421
    %v1423 = vpop.xlane.xlu0 %1422
    %v1424 = vsel %vm183, %v1420, 0.0
    %1425 = vadd.xlane.f32.xlu0 %v1424
    %v1426 = vpop.xlane.xlu0 %1425
    %v1427 = vrcp.pop %v1423
    %v1428 = vrcp.pop %v1426
    %v1429 = vmul.f32 %v1418, %v1427
    %v1430 = vmul.f32 %v1420, %v1428
    %1431 = vrot.lane.b32.xlu0 %v1078, 48
    %v1432 = vpop.permute.xlu0 %1431
    %v1435 = vsel %vm183, %v1429, 0
    %1437 = vmatpush.msra.mxu0 0.0
    %1438 = vmatpush.msra.mxu0 0.0
    %1439 = vmatpush.msra.mxu0 0.0
    %1440 = vmatpush.msra.mxu0 0.0
    %1441 = vmatpush.msra.mxu0 0.0
    %1442 = vmatpush.msra.mxu0 0.0
    %1443 = vmatpush.msra.mxu0 0.0
    %1444 = vmatpush.msra.mxu0 0.0
    %1445 = vmatpush.msra.mxu0 0.0
    %1446 = vmatpush.msra.mxu0 0.0
    %1447 = vmatpush.msra.mxu0 0.0
    %1448 = vmatpush.msra.mxu0 0.0
    %1449 = vmatpush.msra.mxu0 0.0
    %1450 = vmatpush.msra.mxu0 0.0
    %1451 = vmatpush.msra.mxu0 0.0
    %1452 = vmatpush.msra.mxu0 %v1432
    %1453 = vmatmul.f32.gmra.mxu0 %v1435
    %v1454 = vpop.f32.mrf.mxu0
    %v1455 = vadd.f32 0.0, %v1454
    %1456 = vdwg.mxu0
    %1457 = vrot.lane.b32.xlu0 %v1081, 48
    %v1458 = vpop.permute.xlu0 %1457
    %v1461 = vsel %vm183, %v1430, 0
    %1463 = vmatpush.msra.mxu0 0.0
    %1464 = vmatpush.msra.mxu0 0.0
    %1465 = vmatpush.msra.mxu0 0.0
    %1466 = vmatpush.msra.mxu0 0.0
    %1467 = vmatpush.msra.mxu0 0.0
    %1468 = vmatpush.msra.mxu0 0.0
    %1469 = vmatpush.msra.mxu0 0.0
    %1470 = vmatpush.msra.mxu0 0.0
    %1471 = vmatpush.msra.mxu0 0.0
    %1472 = vmatpush.msra.mxu0 0.0
    %1473 = vmatpush.msra.mxu0 0.0
    %1474 = vmatpush.msra.mxu0 0.0
    %1475 = vmatpush.msra.mxu0 0.0
    %1476 = vmatpush.msra.mxu0 0.0
    %1477 = vmatpush.msra.mxu0 0.0
    %1478 = vmatpush.msra.mxu0 %v1458
    %1479 = vmatmul.f32.gmra.mxu0 %v1461
    %v1480 = vpop.f32.mrf.mxu0
    %v1481 = vadd.f32 0.0, %v1480
    %1482 = vdwg.mxu0
    %1483 = vrot.lane.b32.xlu0 %v1078, 104
    %v1484 = vpop.permute.xlu0 %1483
    %1485 = vrot.lane.b32.xlu0 %v1078, 72
    %v1486 = vpop.permute.xlu0 %1485
    %v1487 = vsel %vm183, %v1484, 0
    %v1489 = vsel %vm183, %v1486, 0
    %1491 = vmatpush.xpose.msra.mxu0 0.0
    %1492 = vmatpush.xpose.msra.mxu0 0.0
    %1493 = vmatpush.xpose.msra.mxu0 0.0
    %1494 = vmatpush.xpose.msra.mxu0 0.0
    %1495 = vmatpush.xpose.msra.mxu0 0.0
    %1496 = vmatpush.xpose.msra.mxu0 0.0
    %1497 = vmatpush.xpose.msra.mxu0 0.0
    %1498 = vmatpush.xpose.msra.mxu0 0.0
    %1499 = vmatpush.xpose.msra.mxu0 0.0
    %1500 = vmatpush.xpose.msra.mxu0 0.0
    %1501 = vmatpush.xpose.msra.mxu0 0.0
    %1502 = vmatpush.xpose.msra.mxu0 0.0
    %1503 = vmatpush.xpose.msra.mxu0 0.0
    %1504 = vmatpush.xpose.msra.mxu0 0.0
    %1505 = vmatpush.xpose.msra.mxu0 0.0
    %1506 = vmatpush.xpose.msra.mxu0 %v1489
    %1507 = vmatmul.f32.gmra.mxu0 %v1487
    %v1508 = vpop.f32.mrf.mxu0
    %v1509 = vadd.f32 0.0, %v1508
    %1510 = vdwg.mxu0
    %1511 = vrot.lane.b32.xlu0 %v1081, 104
    %v1512 = vpop.permute.xlu0 %1511
    %1513 = vrot.lane.b32.xlu0 %v1081, 72
    %v1514 = vpop.permute.xlu0 %1513
    %v1515 = vsel %vm183, %v1512, 0
    %v1517 = vsel %vm183, %v1514, 0
    %1519 = vmatpush.xpose.msra.mxu0 0.0
    %1520 = vmatpush.xpose.msra.mxu0 0.0
    %1521 = vmatpush.xpose.msra.mxu0 0.0
    %1522 = vmatpush.xpose.msra.mxu0 0.0
    %1523 = vmatpush.xpose.msra.mxu0 0.0
    %1524 = vmatpush.xpose.msra.mxu0 0.0
    %1525 = vmatpush.xpose.msra.mxu0 0.0
    %1526 = vmatpush.xpose.msra.mxu0 0.0
    %1527 = vmatpush.xpose.msra.mxu0 0.0
    %1528 = vmatpush.xpose.msra.mxu0 0.0
    %1529 = vmatpush.xpose.msra.mxu0 0.0
    %1530 = vmatpush.xpose.msra.mxu0 0.0
    %1531 = vmatpush.xpose.msra.mxu0 0.0
    %1532 = vmatpush.xpose.msra.mxu0 0.0
    %1533 = vmatpush.xpose.msra.mxu0 0.0
    %1534 = vmatpush.xpose.msra.mxu0 %v1517
    %1535 = vmatmul.f32.gmra.mxu0 %v1515
    %v1536 = vpop.f32.mrf.mxu0
    %v1537 = vadd.f32 0.0, %v1536
    %1538 = vdwg.mxu0
    %v1539 = vmul.f32 %v1509, 0.35355338
    %v1540 = vmul.f32 %v1537, 0.35355338
    %v1541 = vadd.f32 %v1539, %v239
    %v1542 = vadd.f32 %v1540, %v240
    %v1543 = vsel %vm183, %v1541, -inf
    %1544 = vmax.xlane.f32.xlu0 %v1543
    %v1545 = vpop.xlane.xlu0 %1544
    %v1546 = vsel %vm183, %v1542, -inf
    %1547 = vmax.xlane.f32.xlu0 %v1546
    %v1548 = vpop.xlane.xlu0 %1547
    %v1549 = vsub.f32 %v1541, %v1545
    %v1550 = vsub.f32 %v1542, %v1548
    %v1551 = vmul.f32 %v1549, 1.442695
    %v1552 = vpow.pop %v1551
    %v1553 = vmul.f32 %v1550, 1.442695
    %v1554 = vpow.pop %v1553
    %v1555 = vsel %vm183, %v1552, 0.0
    %1556 = vadd.xlane.f32.xlu0 %v1555
    %v1557 = vpop.xlane.xlu0 %1556
    %v1558 = vsel %vm183, %v1554, 0.0
    %1559 = vadd.xlane.f32.xlu0 %v1558
    %v1560 = vpop.xlane.xlu0 %1559
    %v1561 = vrcp.pop %v1557
    %v1562 = vrcp.pop %v1560
    %v1563 = vmul.f32 %v1552, %v1561
    %v1564 = vmul.f32 %v1554, %v1562
    %1565 = vrot.lane.b32.xlu0 %v1078, 40
    %v1566 = vpop.permute.xlu0 %1565
    %v1569 = vsel %vm183, %v1563, 0
    %1571 = vmatpush.msra.mxu0 0.0
    %1572 = vmatpush.msra.mxu0 0.0
    %1573 = vmatpush.msra.mxu0 0.0
    %1574 = vmatpush.msra.mxu0 0.0
    %1575 = vmatpush.msra.mxu0 0.0
    %1576 = vmatpush.msra.mxu0 0.0
    %1577 = vmatpush.msra.mxu0 0.0
    %1578 = vmatpush.msra.mxu0 0.0
    %1579 = vmatpush.msra.mxu0 0.0
    %1580 = vmatpush.msra.mxu0 0.0
    %1581 = vmatpush.msra.mxu0 0.0
    %1582 = vmatpush.msra.mxu0 0.0
    %1583 = vmatpush.msra.mxu0 0.0
    %1584 = vmatpush.msra.mxu0 0.0
    %1585 = vmatpush.msra.mxu0 0.0
    %1586 = vmatpush.msra.mxu0 %v1566
    %1587 = vmatmul.f32.gmra.mxu0 %v1569
    %v1588 = vpop.f32.mrf.mxu0
    %v1589 = vadd.f32 0.0, %v1588
    %1590 = vdwg.mxu0
    %1591 = vrot.lane.b32.xlu0 %v1081, 40
    %v1592 = vpop.permute.xlu0 %1591
    %v1595 = vsel %vm183, %v1564, 0
    %1597 = vmatpush.msra.mxu0 0.0
    %1598 = vmatpush.msra.mxu0 0.0
    %1599 = vmatpush.msra.mxu0 0.0
    %1600 = vmatpush.msra.mxu0 0.0
    %1601 = vmatpush.msra.mxu0 0.0
    %1602 = vmatpush.msra.mxu0 0.0
    %1603 = vmatpush.msra.mxu0 0.0
    %1604 = vmatpush.msra.mxu0 0.0
    %1605 = vmatpush.msra.mxu0 0.0
    %1606 = vmatpush.msra.mxu0 0.0
    %1607 = vmatpush.msra.mxu0 0.0
    %1608 = vmatpush.msra.mxu0 0.0
    %1609 = vmatpush.msra.mxu0 0.0
    %1610 = vmatpush.msra.mxu0 0.0
    %1611 = vmatpush.msra.mxu0 0.0
    %1612 = vmatpush.msra.mxu0 %v1592
    %1613 = vmatmul.f32.gmra.mxu0 %v1595
    %v1614 = vpop.f32.mrf.mxu0
    %v1615 = vadd.f32 0.0, %v1614
    %1616 = vdwg.mxu0
    %1619 = vrot.lane.b32.xlu0 %v1321, 8
    %v1620 = vpop.permute.xlu0 %1619
    %1621 = vrot.lane.b32.xlu0 %v1347, 8
    %v1622 = vpop.permute.xlu0 %1621
    %1627 = vrot.lane.b32.xlu0 %v1455, 16
    %v1628 = vpop.permute.xlu0 %1627
    %1629 = vrot.lane.b32.xlu0 %v1481, 16
    %v1630 = vpop.permute.xlu0 %1629
    %1635 = vrot.lane.b32.xlu0 %v1589, 24
    %v1636 = vpop.permute.xlu0 %1635
    %1637 = vrot.lane.b32.xlu0 %v1615, 24
    %v1638 = vpop.permute.xlu0 %1637
    %v1641 = vsel %vm183, %v1187, %v1620
    %v1642 = vsel %vm183, %v1213, %v1622
    %v1643 = vsel %vm747, %v1641, %v1628
    %v1644 = vsel %vm747, %v1642, %v1630
    %v1645 = vsel %vm750, %v1643, %v1636
    %v1646 = vsel %vm750, %v1644, %v1638
    %v1647 = vperm.slane %v1046, 0
    %v1649 = vsel %vm66, %v1645, 0
    %v1652 = vsel %vm66, %v1646, 0
    %1654 = vmatpush.msra.mxu0 0.0
    %1655 = vmatpush.msra.mxu0 0.0
    %1656 = vmatpush.msra.mxu0 0.0
    %1657 = vmatpush.msra.mxu0 0.0
    %1658 = vmatpush.msra.mxu0 0.0
    %1659 = vmatpush.msra.mxu0 0.0
    %1660 = vmatpush.msra.mxu0 0.0
    %1661 = vmatpush.msra.mxu0 0.0
    %1662 = vmatpush.msra.mxu0 0.0
    %1663 = vmatpush.msra.mxu0 0.0
    %1664 = vmatpush.msra.mxu0 0.0
    %1665 = vmatpush.msra.mxu0 0.0
    %1666 = vmatpush.msra.mxu0 %v1036
    %1667 = vmatpush.msra.mxu0 %v1035
    %1668 = vmatpush.msra.mxu0 %v1034
    %1669 = vmatpush.msra.mxu0 %v1033
    %1670 = vmatmul.f32.gmra.mxu0 %v1649
    %v1671 = vpop.f32.mrf.mxu0
    %v1672 = vadd.f32 %v1647, %v1671
    %1673 = vmatmul.f32.gmra.mxu0 %v1652
    %v1674 = vpop.f32.mrf.mxu0
    %v1675 = vadd.f32 %v1647, %v1674
    %1676 = vdwg.mxu0
    %v1677 = vadd.f32 %v1027, %v1672
    %v1678 = vadd.f32 %v1028, %v1675
    %v1679 = vsel %vm66, %v1677, 0.0
    %1680 = vadd.xlane.f32.xlu0 %v1679
    %v1681 = vpop.xlane.xlu0 %1680
    %v1682 = vsel %vm66, %v1678, 0.0
    %1683 = vadd.xlane.f32.xlu0 %v1682
    %v1684 = vpop.xlane.xlu0 %1683
    %v1685 = vmul.f32 %v1681, %v79
    %v1686 = vmul.f32 %v1684, %v79
    %v1687 = vsub.f32 %v1677, %v1685
    %v1688 = vsub.f32 %v1678, %v1686
    %v1689 = vmul.f32 %v1687, %v1687
    %v1690 = vmul.f32 %v1688, %v1688
    %v1691 = vsel %vm66, %v1689, 0.0
    %1692 = vadd.xlane.f32.xlu0 %v1691
    %v1693 = vpop.xlane.xlu0 %1692
    %v1694 = vsel %vm66, %v1690, 0.0
    %1695 = vadd.xlane.f32.xlu0 %v1694
    %v1696 = vpop.xlane.xlu0 %1695
    %v1697 = vmul.f32 %v1693, %v79
    %v1698 = vmul.f32 %v1696, %v79
    %v1699 = vadd.f32 %v1697, 1e-12
    %v1700 = vadd.f32 %v1698, 1e-12
    %v1701 = vrsqrt.pop %v1699
    %v1702 = vmul.f32 %v1701, %v1699
    %v1703 = vmul.f32 %v1702, %v1701
    %v1704 = vmul.f32 0.5, %v1703
    %v1705 = vsub.f32 1.5, %v1704
    %v1706 = vmul.f32 %v1701, %v1705
    %vm1707 = vweird.f32 %v1699
    %vm1708 = vweird.f32 %v1701
    %vm1709 = vmor %vm1707, %vm1708
    %v1710 = vsel %vm1709, %v1701, %v1706
    %v1711 = vrsqrt.pop %v1700
    %v1712 = vmul.f32 %v1711, %v1700
    %v1713 = vmul.f32 %v1712, %v1711
    %v1714 = vmul.f32 0.5, %v1713
    %v1715 = vsub.f32 1.5, %v1714
    %v1716 = vmul.f32 %v1711, %v1715
    %vm1717 = vweird.f32 %v1700
    %vm1718 = vweird.f32 %v1711
    %vm1719 = vmor %vm1717, %vm1718
    %v1720 = vsel %vm1719, %v1711, %v1716
    %v1721 = vmul.f32 %v1687, %v1710
    %v1722 = vmul.f32 %v1688, %v1720
    %v1723 = vperm.slane %v1049, 0
    %v1724 = vmul.f32 %v1721, %v1723
    %v1725 = vmul.f32 %v1722, %v1723
    %v1726 = vperm.slane %v1050, 0
    %v1727 = vadd.f32 %v1724, %v1726
    %v1728 = vadd.f32 %v1725, %v1726
    %v1729 = vperm.slane %v1047, 0
    %v1731 = vsel %vm66, %v1727, 0
    %v1734 = vsel %vm66, %v1728, 0
    %1736 = vmatpush.msra.mxu0 0.0
    %1737 = vmatpush.msra.mxu0 0.0
    %1738 = vmatpush.msra.mxu0 0.0
    %1739 = vmatpush.msra.mxu0 0.0
    %1740 = vmatpush.msra.mxu0 0.0
    %1741 = vmatpush.msra.mxu0 0.0
    %1742 = vmatpush.msra.mxu0 0.0
    %1743 = vmatpush.msra.mxu0 0.0
    %1744 = vmatpush.msra.mxu0 0.0
    %1745 = vmatpush.msra.mxu0 0.0
    %1746 = vmatpush.msra.mxu0 0.0
    %1747 = vmatpush.msra.mxu0 0.0
    %1748 = vmatpush.msra.mxu0 %v1040
    %1749 = vmatpush.msra.mxu0 %v1039
    %1750 = vmatpush.msra.mxu0 %v1038
    %1751 = vmatpush.msra.mxu0 %v1037
    %1752 = vmatmul.f32.gmra.mxu0 %v1731
    %v1753 = vpop.f32.mrf.mxu0
    %v1754 = vadd.f32 %v1729, %v1753
    %1755 = vmatmul.f32.gmra.mxu0 %v1734
    %v1756 = vpop.f32.mrf.mxu0
    %v1757 = vadd.f32 %v1729, %v1756
    %1758 = vdwg.mxu0
    %v1759 = vmul.f32 %v1754, 0.5
    %v1760 = vmul.f32 %v1757, 0.5
    %v1761 = vmul.f32 %v1754, 0.70710677
    %v1762 = vmul.f32 %v1757, 0.70710677
    %v1763 = vmul.f32 %v1761, %v1761
    %v1764 = vmin.f32 16.0, %v1763
    %v1765 = vmul.f32 %v1764, 2.1237322e-06
    %v1766 = vadd.f32 %v1765, 0.00028619796
    %v1767 = vmul.f32 %v1764, %v1766
    %v1768 = vadd.f32 %v1767, 0.0036580483
    %v1769 = vmul.f32 %v1764, %v1768
    %v1770 = vadd.f32 %v1769, 0.05243302
    %v1771 = vmul.f32 %v1764, %v1770
    %v1772 = vadd.f32 %v1771, 0.18741608
    %v1773 = vmul.f32 %v1764, %v1772
    %v1774 = vadd.f32 %v1773, 1.1283791
    %v1775 = vmul.f32 %v1761, %v1774
    %v1776 = vmul.f32 %v1764, 3.8918573e-05
    %v1777 = vadd.f32 %v1776, 0.001143296
    %v1778 = vmul.f32 %v1764, %v1777
    %v1779 = vadd.f32 %v1778, 0.014752088
    %v1780 = vmul.f32 %v1764, %v1779
    %v1781 = vadd.f32 %v1780, 0.112945676
    %v1782 = vmul.f32 %v1764, %v1781
    %v1783 = vadd.f32 %v1782, 0.4994258
    %v1784 = vmul.f32 %v1764, %v1783
    %v1785 = vadd.f32 %v1784, 1.0
    %v1786 = vrcp.pop %v1785
    %v1787 = vmul.f32 %v1785, %v1786
    %v1788 = vsub.f32 1.0, %v1787
    %v1789 = vmul.f32 %v1786, %v1788
    %v1790 = vadd.f32 %v1786, %v1789
    %vm1791 = vweird.f32 %v1785
    %vm1792 = vweird.f32 %v1786
    %vm1793 = vmor %vm1791, %vm1792
    %v1794 = vsel %vm1793, %v1786, %v1790
    %v1795 = vand.u32 2147483647, %v1785
    %vm1796 = vcmp.eq.f32.partialorder %v1795, 8.507059e+37
    %v1797 = vand.u32 %v1785, 2147483648
    %v1798 = vor.u32 1.1754944e-38, %v1797
    %v1799 = vsel %vm1796, %v1798, %v1794
    %v1800 = vmul.f32 %v1775, %v1799
    %v1801 = vmin.f32 %v1800, 1.0
    %v1802 = vmax.f32 %v1801, -1.0
    %v1803 = vmul.f32 %v1762, %v1762
    %v1804 = vmin.f32 16.0, %v1803
    %v1805 = vmul.f32 %v1804, 2.1237322e-06
    %v1806 = vadd.f32 %v1805, 0.00028619796
    %v1807 = vmul.f32 %v1804, %v1806
    %v1808 = vadd.f32 %v1807, 0.0036580483
    %v1809 = vmul.f32 %v1804, %v1808
    %v1810 = vadd.f32 %v1809, 0.05243302
    %v1811 = vmul.f32 %v1804, %v1810
    %v1812 = vadd.f32 %v1811, 0.18741608
    %v1813 = vmul.f32 %v1804, %v1812
    %v1814 = vadd.f32 %v1813, 1.1283791
    %v1815 = vmul.f32 %v1762, %v1814
    %v1816 = vmul.f32 %v1804, 3.8918573e-05
    %v1817 = vadd.f32 %v1816, 0.001143296
    %v1818 = vmul.f32 %v1804, %v1817
    %v1819 = vadd.f32 %v1818, 0.014752088
    %v1820 = vmul.f32 %v1804, %v1819
    %v1821 = vadd.f32 %v1820, 0.112945676
    %v1822 = vmul.f32 %v1804, %v1821
    %v1823 = vadd.f32 %v1822, 0.4994258
    %v1824 = vmul.f32 %v1804, %v1823
    %v1825 = vadd.f32 %v1824, 1.0
    %v1826 = vrcp.pop %v1825
    %v1827 = vmul.f32 %v1825, %v1826
    %v1828 = vsub.f32 1.0, %v1827
    %v1829 = vmul.f32 %v1826, %v1828
    %v1830 = vadd.f32 %v1826, %v1829
    %vm1831 = vweird.f32 %v1825
    %vm1832 = vweird.f32 %v1826
    %vm1833 = vmor %vm1831, %vm1832
    %v1834 = vsel %vm1833, %v1826, %v1830
    %v1835 = vand.u32 2147483647, %v1825
    %vm1836 = vcmp.eq.f32.partialorder %v1835, 8.507059e+37
    %v1837 = vand.u32 %v1825, 2147483648
    %v1838 = vor.u32 1.1754944e-38, %v1837
    %v1839 = vsel %vm1836, %v1838, %v1834
    %v1840 = vmul.f32 %v1815, %v1839
    %v1841 = vmin.f32 %v1840, 1.0
    %v1842 = vmax.f32 %v1841, -1.0
    %v1843 = vadd.f32 %v1802, 1.0
    %v1844 = vadd.f32 %v1842, 1.0
    %v1845 = vmul.f32 %v1759, %v1843
    %v1846 = vmul.f32 %v1760, %v1844
    %v1847 = vperm.slane %v1048, 0
    %1848 = vmatpush.xpose.msra.mxu0 0.0
    %1849 = vmatpush.xpose.msra.mxu0 0.0
    %1850 = vmatpush.xpose.msra.mxu0 0.0
    %1851 = vmatpush.xpose.msra.mxu0 0.0
    %1852 = vmatpush.xpose.msra.mxu0 0.0
    %1853 = vmatpush.xpose.msra.mxu0 0.0
    %1854 = vmatpush.xpose.msra.mxu0 0.0
    %1855 = vmatpush.xpose.msra.mxu0 0.0
    %1856 = vmatpush.xpose.msra.mxu0 0.0
    %1857 = vmatpush.xpose.msra.mxu0 0.0
    %1858 = vmatpush.xpose.msra.mxu0 0.0
    %1859 = vmatpush.xpose.msra.mxu0 0.0
    %1860 = vmatpush.xpose.msra.mxu0 %v1044
    %1861 = vmatpush.xpose.msra.mxu0 %v1043
    %1862 = vmatpush.xpose.msra.mxu0 %v1042
    %1863 = vmatpush.xpose.msra.mxu0 %v1041
    %1864 = vmatmul.f32.gmra.mxu0 %v1845
    %v1865 = vpop.f32.mrf.mxu0
    %v1866 = vadd.f32 %v1847, %v1865
    %1867 = vmatmul.f32.gmra.mxu0 %v1846
    %v1868 = vpop.f32.mrf.mxu0
    %v1869 = vadd.f32 %v1847, %v1868
    %1870 = vdwg.mxu0
    %v1871 = vadd.f32 %v1727, %v1866
    %v1872 = vadd.f32 %v1728, %v1869
    %v1873 = vsel %vm66, %v1871, 0.0
    %1874 = vadd.xlane.f32.xlu0 %v1873
    %v1875 = vpop.xlane.xlu0 %1874
    %v1876 = vsel %vm66, %v1872, 0.0
    %1877 = vadd.xlane.f32.xlu0 %v1876
    %v1878 = vpop.xlane.xlu0 %1877
    %v1879 = vmul.f32 %v1875, %v79
    %v1880 = vmul.f32 %v1878, %v79
    %v1881 = vsub.f32 %v1871, %v1879
    %v1882 = vsub.f32 %v1872, %v1880
    %v1883 = vmul.f32 %v1881, %v1881
    %v1884 = vmul.f32 %v1882, %v1882
    %v1885 = vsel %vm66, %v1883, 0.0
    %1886 = vadd.xlane.f32.xlu0 %v1885
    %v1887 = vpop.xlane.xlu0 %1886
    %v1888 = vsel %vm66, %v1884, 0.0
    %1889 = vadd.xlane.f32.xlu0 %v1888
    %v1890 = vpop.xlane.xlu0 %1889
    %v1891 = vmul.f32 %v1887, %v79
    %v1892 = vmul.f32 %v1890, %v79
    %v1893 = vadd.f32 %v1891, 1e-12
    %v1894 = vadd.f32 %v1892, 1e-12
    %v1895 = vrsqrt.pop %v1893
    %v1896 = vmul.f32 %v1895, %v1893
    %v1897 = vmul.f32 %v1896, %v1895
    %v1898 = vmul.f32 0.5, %v1897
    %v1899 = vsub.f32 1.5, %v1898
    %v1900 = vmul.f32 %v1895, %v1899
    %vm1901 = vweird.f32 %v1893
    %vm1902 = vweird.f32 %v1895
    %vm1903 = vmor %vm1901, %vm1902
    %v1904 = vsel %vm1903, %v1895, %v1900
    %v1905 = vrsqrt.pop %v1894
    %v1906 = vmul.f32 %v1905, %v1894
    %v1907 = vmul.f32 %v1906, %v1905
    %v1908 = vmul.f32 0.5, %v1907
    %v1909 = vsub.f32 1.5, %v1908
    %v1910 = vmul.f32 %v1905, %v1909
    %vm1911 = vweird.f32 %v1894
    %vm1912 = vweird.f32 %v1905
    %vm1913 = vmor %vm1911, %vm1912
    %v1914 = vsel %vm1913, %v1905, %v1910
    %v1915 = vmul.f32 %v1881, %v1904
    %v1916 = vmul.f32 %v1882, %v1914
    %v1917 = vperm.slane %v1051, 0
    %v1918 = vmul.f32 %v1915, %v1917
    %v1919 = vmul.f32 %v1916, %v1917
    %v1920 = vperm.slane %v1052, 0
    %v1921 = vadd.f32 %v1918, %v1920
    %v1922 = vadd.f32 %v1919, %v1920
    %1923 = vst.msk [vmem:[#allocation8] sm:$0xff] %vm66, %v1921
    %1924 = vst.msk [vmem:[#allocation8 + $0x8] sm:$0xff] %vm66, %v1922
    // Predicated region
    $region26: #{tpu_custom_call.1} parent=1 // pred_check
      _
    $region27: #{tpu_custom_call.1} parent=1 // pred_check_branch
      %1926 = sbr.rel (0) target = $region29
    $region28: #{tpu_custom_call.1} parent=1 // pred_region
      %1928 = vsyncadd [#allocation4], 0
      %s1929 = sshll.u32 [#allocation8], 4
      %s1930 = int_to_ptr.vmem [resolvable:$true] %s1929
      %s1931 = sshll.u32 %s3, 4
      %s1932 = int_to_ptr.hbm [resolvable:$true] %s1931
      %1937 = dma.vmem_to_hbm [thread:$0]  %s1930, 256, %s1932, [#allocation4], 128, 128, 8
    $region29: #{tpu_custom_call.1} parent=1 // pred_fallthru
      _
    // Predicated region
    $region30: #{tpu_custom_call.1} parent=1 // pred_check
      _
    $region31: #{tpu_custom_call.1} parent=1 // pred_check_branch
      %1939 = sbr.rel (0) target = $region33
    $region32: #{tpu_custom_call.1} parent=1 // pred_region
      %1941 = dma.done [#allocation4], 256
    $region33: #{tpu_custom_call.1} parent=1 // pred_fallthru
      _
    %1942 = vsyncpa [#allocation3], 1
    %1943 = vsyncpa [#allocation6], 1
    %1944 = vsyncpa [#allocation4], 1

</llo_original>
